<compile_context>
chip_gen: v7x
topology: tpu7x:2x2x1
jax: 0.10.0
libtpu: 0.0.40
codegen_flags: <defaults>
</compile_context>

<pallas_src>
import math

import jax
import jax.numpy as jnp
from jax.experimental import pallas as pl
from jax.experimental.pallas import tpu as pltpu

LN_EPS = 1e-5
BN_EPS = 1e-5


# ----------------------------------------------------------------------------
# Single fused kernel: QKV proj -> masked softmax attention -> out proj ->
# residual LayerNorm -> masked mean pool -> (BN-folded) MLP generator.
# ----------------------------------------------------------------------------
def _pic_kernel(pad_ref,                       # SMEM (B,) int32 padding-start idx
                x_ref,                         # (B, S, E)
                wq_ref, wk_ref, wv_ref,        # (E, E) each (pre-transposed)
                bq_ref, bk_ref, bv_ref,        # (1, E) each
                wo_ref, bo_ref,                # (E, E), (1, E)
                ln_g_ref, ln_b_ref,            # (1, E) each
                w1_ref, b1_ref,                # (E, 2H), (1, 2H)   [BN1 folded in]
                w2_ref, b2_ref,                # (2H, H), (1, H)    [BN2 folded in]
                w3_ref, b3_ref,                # (H, out), (1, out)
                out_ref):                      # (B, out)
    B, S, E = x_ref.shape
    BS = B * S

    x3 = x_ref[...]                            # (B, S, E)
    x2 = x3.reshape(BS, E)                     # batch-flattened for lane-dense matmuls

    q = (jnp.dot(x2, wq_ref[...], preferred_element_type=jnp.float32)
         + bq_ref[...]).reshape(B, S, E)
    k = (jnp.dot(x2, wk_ref[...], preferred_element_type=jnp.float32)
         + bk_ref[...]).reshape(B, S, E)
    v = (jnp.dot(x2, wv_ref[...], preferred_element_type=jnp.float32)
         + bv_ref[...]).reshape(B, S, E)

    # --- masks built from the SMEM padding indices (static unroll over B) ----
    col3 = jax.lax.broadcasted_iota(jnp.int32, (B, S, S), 2)
    bid3 = jax.lax.broadcasted_iota(jnp.int32, (B, S, S), 0)
    pos2 = jax.lax.broadcasted_iota(jnp.int32, (B, BS), 1)
    bid2 = jax.lax.broadcasted_iota(jnp.int32, (B, BS), 0)
    neg = jnp.zeros((B, S, S), jnp.float32)    # additive key-padding mask
    sel = jnp.zeros((B, BS), jnp.float32)      # masked-mean pooling matrix
    for b in range(B):                         # B is static at trace time
        pad_b = pad_ref[b]
        valid_b = jnp.where(pad_b == -1, S, pad_b).astype(jnp.int32)
        neg = jnp.where((bid3 == b) & (col3 >= valid_b), -1e30, neg)
        # guard valid_b == 0 (fully padded sequence) against divide-by-zero
        inv_b = 1.0 / jnp.maximum(valid_b, 1).astype(jnp.float32)
        sel = jnp.where((bid2 == b) & (pos2 >= b * S) & (pos2 < b * S + valid_b),
                        inv_b, sel)

    # --- single-head attention ----------------------------------------------
    s = jnp.einsum("bqd,bkd->bqk", q, k, preferred_element_type=jnp.float32)
    s = s * (1.0 / math.sqrt(E)) + neg
    m = jnp.max(s, axis=-1, keepdims=True)
    p = jnp.exp(s - m)
    attn = p * pl.reciprocal(jnp.sum(p, axis=-1, keepdims=True), approx=True)
    # TODO(synk): attention dropout skipped (inference semantics).
    ctx = jnp.einsum("bqk,bkd->bqd", attn, v, preferred_element_type=jnp.float32)

    o = jnp.dot(ctx.reshape(BS, E), wo_ref[...],
                preferred_element_type=jnp.float32) + bo_ref[...]

    # residual + LayerNorm:  out = x + LN(attn_out)
    mu = jnp.mean(o, axis=-1, keepdims=True)
    var = jnp.mean(jnp.square(o - mu), axis=-1, keepdims=True)
    ln = (o - mu) * jax.lax.rsqrt(var + LN_EPS) * ln_g_ref[...] + ln_b_ref[...]
    out2 = x2 + ln                             # (BS, E)

    # masked mean pool as one MXU matmul
    pooled = jnp.dot(sel, out2, preferred_element_type=jnp.float32)       # (B, E)

    # --- generator MLP (BN folded into the linears, dropout = identity) -----
    # TODO(synk): linear dropout skipped (inference semantics).
    h = jnp.maximum(jnp.dot(pooled, w1_ref[...],
                            preferred_element_type=jnp.float32) + b1_ref[...], 0.0)
    h = jnp.maximum(jnp.dot(h, w2_ref[...],
                            preferred_element_type=jnp.float32) + b2_ref[...], 0.0)
    out_ref[...] = (jnp.dot(h, w3_ref[...], preferred_element_type=jnp.float32)
                    + b3_ref[...]).astype(out_ref.dtype)


def pic_forward(x, start_padding_indices, params):
    B, S, E = x.shape
    out_dim = params["w3"].shape[1]
    pad = start_padding_indices.astype(jnp.int32)

    def full(shape):
        return pl.BlockSpec(shape, lambda i, pad_ref: (0,) * len(shape))

    grid_spec = pltpu.PrefetchScalarGridSpec(
        num_scalar_prefetch=1,
        grid=(1,),                       # one step: whole problem fits in VMEM
        in_specs=[
            full((B, S, E)),
            full((E, E)), full((E, E)), full((E, E)),
            full((1, E)), full((1, E)), full((1, E)),
            full((E, E)), full((1, E)),
            full((1, E)), full((1, E)),
            full(params["w1f"].shape), full(params["b1f"].shape),
            full(params["w2f"].shape), full(params["b2f"].shape),
            full(params["w3"].shape), full(params["b3"].shape),
        ],
        out_specs=pl.BlockSpec((B, out_dim), lambda i, pad_ref: (0, 0)),
    )
    return pl.pallas_call(
        _pic_kernel,
        out_shape=jax.ShapeDtypeStruct((B, out_dim), jnp.float32),
        grid_spec=grid_spec,
    )(pad, x,
      params["wq"], params["wk"], params["wv"],
      params["bq"], params["bk"], params["bv"],
      params["wo"], params["bo"], params["ln_g"], params["ln_b"],
      params["w1f"], params["b1f"], params["w2f"], params["b2f"],
      params["w3"], params["b3"])


# ----------------------------------------------------------------------------
# Deterministic parameter construction (synthetic weights, not a checkpoint).
# Returns (kernel_params with BN folded, ref_params unfolded for the check).
# ----------------------------------------------------------------------------
def make_params(key, E, H, out_dim):
    ks = list(jax.random.split(key, 20))

    def nrm(k, shape, s=0.05):
        return jax.random.normal(k, shape, jnp.float32) * s

    # nn.MultiheadAttention: in_proj_weight (3E, E), out_proj (E, E) — torch layout.
    in_proj_w = nrm(ks[0], (3 * E, E))
    in_proj_b = nrm(ks[1], (3 * E,))
    wo = nrm(ks[2], (E, E))
    bo = nrm(ks[3], (E,))
    ln_g = 1.0 + nrm(ks[4], (E,), 0.01)
    ln_b = nrm(ks[5], (E,), 0.01)

    def bn(kg, kb, km, kv_, n):
        gamma = 1.0 + nrm(kg, (n,), 0.01)
        beta = nrm(kb, (n,), 0.01)
        r_mean = nrm(km, (n,), 0.1)
        r_var = 1.0 + jnp.abs(nrm(kv_, (n,), 0.1))
        scale = gamma / jnp.sqrt(r_var + BN_EPS)
        shift = beta - r_mean * scale
        return scale, shift

    bn1_scale, bn1_shift = bn(ks[6], ks[7], ks[8], ks[9], E)
    w1 = nrm(ks[10], (2 * H, E))            # torch Linear(E, 2H).weight
    b1 = nrm(ks[11], (2 * H,))
    bn2_scale, bn2_shift = bn(ks[12], ks[13], ks[14], ks[15], 2 * H)
    w2 = nrm(ks[16], (H, 2 * H))
    b2 = nrm(ks[17], (H,))
    w3 = nrm(ks[18], (out_dim, H))
    b3 = nrm(ks[19], (out_dim,))

    r1 = lambda a: a.reshape(1, -1)
    wq, wk, wv = in_proj_w[:E], in_proj_w[E:2 * E], in_proj_w[2 * E:]
    bq, bk, bv = in_proj_b[:E], in_proj_b[E:2 * E], in_proj_b[2 * E:]
    w1t, w2t, w3t = w1.T, w2.T, w3.T        # (in, out) layout: lane-dense x @ W

    # Fold eval-mode BatchNorm into the following Linear:
    #   (x*scale + shift) @ W + b  =  x @ (scale[:,None]*W) + (shift @ W + b)
    w1f = bn1_scale[:, None] * w1t
    b1f = r1(bn1_shift @ w1t + b1)
    w2f = bn2_scale[:, None] * w2t
    b2f = r1(bn2_shift @ w2t + b2)

    kernel_params = {
        "wq": wq.T, "wk": wk.T, "wv": wv.T,
        "bq": r1(bq), "bk": r1(bk), "bv": r1(bv),
        "wo": wo.T, "bo": r1(bo),
        "ln_g": r1(ln_g), "ln_b": r1(ln_b),
        "w1f": w1f, "b1f": b1f, "w2f": w2f, "b2f": b2f,
        "w3": w3t, "b3": r1(b3),
    }
    ref_params = {
        "wq": wq.T, "wk": wk.T, "wv": wv.T,
        "bq": r1(bq), "bk": r1(bk), "bv": r1(bv),
        "wo": wo.T, "bo": r1(bo),
        "ln_g": r1(ln_g), "ln_b": r1(ln_b),
        "bn1_scale": r1(bn1_scale), "bn1_shift": r1(bn1_shift),
        "w1": w1t, "b1": r1(b1),
        "bn2_scale": r1(bn2_scale), "bn2_shift": r1(bn2_shift),
        "w2": w2t, "b2": r1(b2),
        "w3": w3t, "b3": r1(b3),
    }
    return kernel_params, ref_params


# ----------------------------------------------------------------------------
# Plain-JAX reference (mirrors the PyTorch forward, BN un-folded).
# ----------------------------------------------------------------------------
def pic_reference(x, pad_idx, rp):
    B, S, E = x.shape
    q = x @ rp["wq"] + rp["bq"]
    k = x @ rp["wk"] + rp["bk"]
    v = x @ rp["wv"] + rp["bv"]
    scores = jnp.einsum("bqd,bkd->bqk", q, k) / math.sqrt(E)
    valid = jnp.where(pad_idx == -1, S, pad_idx).astype(jnp.int32)        # (B,)
    col = jnp.arange(S)[None, None, :]
    scores = jnp.where(col >= valid[:, None, None], -1e30, scores)
    attn = jax.nn.softmax(scores, axis=-1)
    ctx = jnp.einsum("bqk,bkd->bqd", attn, v)
    o = ctx @ rp["wo"] + rp["bo"]
    mu = o.mean(-1, keepdims=True)
    var = ((o - mu) ** 2).mean(-1, keepdims=True)
    ln = (o - mu) / jnp.sqrt(var + LN_EPS) * rp["ln_g"] + rp["ln_b"]
    out = x + ln
    keep = (jnp.arange(S)[None, :, None] < valid[:, None, None]).astype(jnp.float32)
    pooled = (out * keep).sum(1) / valid[:, None].astype(jnp.float32)
    h = pooled * rp["bn1_scale"] + rp["bn1_shift"]
    h = jnp.maximum(h @ rp["w1"] + rp["b1"], 0.0)
    h = h * rp["bn2_scale"] + rp["bn2_shift"]
    h = jnp.maximum(h @ rp["w2"] + rp["b2"], 0.0)
    return h @ rp["w3"] + rp["b3"]


if __name__ == "__main__":
    B, S, E = 2, 8, 16        # batch, seq_len, input_shape
    H, OUT = 32, 4            # hidden_units, output_shape

    key = jax.random.PRNGKey(0)
    kx, kp = jax.random.split(key)
    x = jax.random.normal(kx, (B, S, E), jnp.float32)
    start_padding_indices = jnp.array([5, -1], dtype=jnp.int32)
    kernel_params, ref_params = make_params(kp, E, H, OUT)

    y = pic_forward(x, start_padding_indices, kernel_params)
    y = jax.block_until_ready(y)

    y_ref = pic_reference(x, start_padding_indices, ref_params)
    assert y.shape == (B, OUT)
    # tolerance accommodates pl.reciprocal(approx=True) in the softmax
    assert jnp.allclose(y, y_ref, atol=1e-3, rtol=1e-3), (y, y_ref)

    print("KERNEL_OK")
</pallas_src>

<mosaic_0001>
module attributes {stable_mosaic.version = 11 : i64} {
  func.func @_pic_kernel(%arg0: i32, %arg1: memref<2xi32, #tpu.memory_space<smem>>, %arg2: memref<2x8x16xf32, #tpu.memory_space<vmem>>, %arg3: memref<16x16xf32, #tpu.memory_space<vmem>>, %arg4: memref<16x16xf32, #tpu.memory_space<vmem>>, %arg5: memref<16x16xf32, #tpu.memory_space<vmem>>, %arg6: memref<1x16xf32, #tpu.memory_space<vmem>>, %arg7: memref<1x16xf32, #tpu.memory_space<vmem>>, %arg8: memref<1x16xf32, #tpu.memory_space<vmem>>, %arg9: memref<16x16xf32, #tpu.memory_space<vmem>>, %arg10: memref<1x16xf32, #tpu.memory_space<vmem>>, %arg11: memref<1x16xf32, #tpu.memory_space<vmem>>, %arg12: memref<1x16xf32, #tpu.memory_space<vmem>>, %arg13: memref<16x64xf32, #tpu.memory_space<vmem>>, %arg14: memref<1x64xf32, #tpu.memory_space<vmem>>, %arg15: memref<64x32xf32, #tpu.memory_space<vmem>>, %arg16: memref<1x32xf32, #tpu.memory_space<vmem>>, %arg17: memref<32x4xf32, #tpu.memory_space<vmem>>, %arg18: memref<1x4xf32, #tpu.memory_space<vmem>>, %arg19: memref<2x4xf32, #tpu.memory_space<vmem>>) attributes {dimension_semantics = [#tpu.dimension_semantics<arbitrary>], iteration_bounds = array<i64: 1>, scalar_prefetch = 1 : i64, scratch_operands = 0 : i64, tpu.core_type = #tpu.core_type<tc>, window_params = [{pipeline_mode = #tpu.pipeline_mode<synchronous>, transform_indices = @transform_0, window_bounds = array<i64: 2, 8, 16>}, {pipeline_mode = #tpu.pipeline_mode<synchronous>, transform_indices = @transform_1, window_bounds = array<i64: 16, 16>}, {pipeline_mode = #tpu.pipeline_mode<synchronous>, transform_indices = @transform_2, window_bounds = array<i64: 16, 16>}, {pipeline_mode = #tpu.pipeline_mode<synchronous>, transform_indices = @transform_3, window_bounds = array<i64: 16, 16>}, {pipeline_mode = #tpu.pipeline_mode<synchronous>, transform_indices = @transform_4, window_bounds = array<i64: 1, 16>}, {pipeline_mode = #tpu.pipeline_mode<synchronous>, transform_indices = @transform_5, window_bounds = array<i64: 1, 16>}, {pipeline_mode = #tpu.pipeline_mode<synchronous>, transform_indices = @transform_6, window_bounds = array<i64: 1, 16>}, {pipeline_mode = #tpu.pipeline_mode<synchronous>, transform_indices = @transform_7, window_bounds = array<i64: 16, 16>}, {pipeline_mode = #tpu.pipeline_mode<synchronous>, transform_indices = @transform_8, window_bounds = array<i64: 1, 16>}, {pipeline_mode = #tpu.pipeline_mode<synchronous>, transform_indices = @transform_9, window_bounds = array<i64: 1, 16>}, {pipeline_mode = #tpu.pipeline_mode<synchronous>, transform_indices = @transform_10, window_bounds = array<i64: 1, 16>}, {pipeline_mode = #tpu.pipeline_mode<synchronous>, transform_indices = @transform_11, window_bounds = array<i64: 16, 64>}, {pipeline_mode = #tpu.pipeline_mode<synchronous>, transform_indices = @transform_12, window_bounds = array<i64: 1, 64>}, {pipeline_mode = #tpu.pipeline_mode<synchronous>, transform_indices = @transform_13, window_bounds = array<i64: 64, 32>}, {pipeline_mode = #tpu.pipeline_mode<synchronous>, transform_indices = @transform_14, window_bounds = array<i64: 1, 32>}, {pipeline_mode = #tpu.pipeline_mode<synchronous>, transform_indices = @transform_15, window_bounds = array<i64: 32, 4>}, {pipeline_mode = #tpu.pipeline_mode<synchronous>, transform_indices = @transform_16, window_bounds = array<i64: 1, 4>}, {pipeline_mode = #tpu.pipeline_mode<synchronous>, transform_indices = @transform_17, window_bounds = array<i64: 2, 4>}]} {
    %c0 = arith.constant 0 : index
    %c0_0 = arith.constant 0 : index
    %c0_1 = arith.constant 0 : index
    %0 = vector.load %arg2[%c0, %c0_0, %c0_1] : memref<2x8x16xf32, #tpu.memory_space<vmem>>, vector<2x8x16xf32>
    %1 = vector.shape_cast %0 : vector<2x8x16xf32> to vector<16x16xf32>
    %c0_2 = arith.constant 0 : index
    %c0_3 = arith.constant 0 : index
    %2 = vector.load %arg3[%c0_2, %c0_3] : memref<16x16xf32, #tpu.memory_space<vmem>>, vector<16x16xf32>
    %cst = arith.constant dense<0.000000e+00> : vector<16x16xf32>
    %3 = tpu.matmul %1, %2, %cst {dimension_numbers = #tpu.dot_dimension_numbers<[1], [0], [0], [1], [0, 0, 1, 1], [], []>} : vector<16x16xf32>, vector<16x16xf32>, vector<16x16xf32> -> vector<16x16xf32>
    %c0_4 = arith.constant 0 : index
    %c0_5 = arith.constant 0 : index
    %4 = vector.load %arg6[%c0_4, %c0_5] : memref<1x16xf32, #tpu.memory_space<vmem>>, vector<1x16xf32>
    %5 = vector.broadcast %4 : vector<1x16xf32> to vector<16x16xf32>
    %6 = arith.addf %3, %5 : vector<16x16xf32>
    %7 = vector.shape_cast %6 : vector<16x16xf32> to vector<2x8x16xf32>
    %c0_6 = arith.constant 0 : index
    %c0_7 = arith.constant 0 : index
    %8 = vector.load %arg4[%c0_6, %c0_7] : memref<16x16xf32, #tpu.memory_space<vmem>>, vector<16x16xf32>
    %cst_8 = arith.constant dense<0.000000e+00> : vector<16x16xf32>
    %9 = tpu.matmul %1, %8, %cst_8 {dimension_numbers = #tpu.dot_dimension_numbers<[1], [0], [0], [1], [0, 0, 1, 1], [], []>} : vector<16x16xf32>, vector<16x16xf32>, vector<16x16xf32> -> vector<16x16xf32>
    %c0_9 = arith.constant 0 : index
    %c0_10 = arith.constant 0 : index
    %10 = vector.load %arg7[%c0_9, %c0_10] : memref<1x16xf32, #tpu.memory_space<vmem>>, vector<1x16xf32>
    %11 = vector.broadcast %10 : vector<1x16xf32> to vector<16x16xf32>
    %12 = arith.addf %9, %11 : vector<16x16xf32>
    %13 = vector.shape_cast %12 : vector<16x16xf32> to vector<2x8x16xf32>
    %c0_11 = arith.constant 0 : index
    %c0_12 = arith.constant 0 : index
    %14 = vector.load %arg5[%c0_11, %c0_12] : memref<16x16xf32, #tpu.memory_space<vmem>>, vector<16x16xf32>
    %cst_13 = arith.constant dense<0.000000e+00> : vector<16x16xf32>
    %15 = tpu.matmul %1, %14, %cst_13 {dimension_numbers = #tpu.dot_dimension_numbers<[1], [0], [0], [1], [0, 0, 1, 1], [], []>} : vector<16x16xf32>, vector<16x16xf32>, vector<16x16xf32> -> vector<16x16xf32>
    %c0_14 = arith.constant 0 : index
    %c0_15 = arith.constant 0 : index
    %16 = vector.load %arg8[%c0_14, %c0_15] : memref<1x16xf32, #tpu.memory_space<vmem>>, vector<1x16xf32>
    %17 = vector.broadcast %16 : vector<1x16xf32> to vector<16x16xf32>
    %18 = arith.addf %15, %17 : vector<16x16xf32>
    %19 = vector.shape_cast %18 : vector<16x16xf32> to vector<2x8x16xf32>
    %20 = tpu.iota {dimensions = array<i32: 2>} : vector<2x8x8xi32>
    %21 = tpu.iota {dimensions = array<i32: 0>} : vector<2x8x8xi32>
    %22 = tpu.iota {dimensions = array<i32: 1>} : vector<2x16xi32>
    %23 = tpu.iota {dimensions = array<i32: 0>} : vector<2x16xi32>
    %cst_16 = arith.constant 0.000000e+00 : f32
    %24 = vector.broadcast %cst_16 : f32 to vector<2x8x8xf32>
    %cst_17 = arith.constant 0.000000e+00 : f32
    %25 = vector.broadcast %cst_17 : f32 to vector<2x16xf32>
    %c0_18 = arith.constant 0 : index
    %26 = memref.load %arg1[%c0_18] : memref<2xi32, #tpu.memory_space<smem>>
    %c-1_i32 = arith.constant -1 : i32
    %27 = arith.cmpi eq, %26, %c-1_i32 : i32
    %c8_i32 = arith.constant 8 : i32
    %28 = arith.select %27, %c8_i32, %26 : i32
    %c0_i32 = arith.constant 0 : i32
    %29 = vector.broadcast %c0_i32 : i32 to vector<2x8x8xi32>
    %30 = arith.cmpi eq, %21, %29 : vector<2x8x8xi32>
    %31 = vector.broadcast %28 : i32 to vector<2x8x8xi32>
    %32 = arith.cmpi sge, %20, %31 : vector<2x8x8xi32>
    %33 = arith.andi %30, %32 : vector<2x8x8xi1>
    %cst_19 = arith.constant -1.000000e+30 : f32
    %34 = vector.broadcast %cst_19 : f32 to vector<2x8x8xf32>
    %35 = arith.select %33, %34, %24 : vector<2x8x8xi1>, vector<2x8x8xf32>
    %c1_i32 = arith.constant 1 : i32
    %36 = arith.maxsi %28, %c1_i32 : i32
    %37 = arith.sitofp %36 : i32 to f32
    %cst_20 = arith.constant 1.000000e+00 : f32
    %38 = arith.divf %cst_20, %37 : f32
    %c0_i32_21 = arith.constant 0 : i32
    %39 = vector.broadcast %c0_i32_21 : i32 to vector<2x16xi32>
    %40 = arith.cmpi eq, %23, %39 : vector<2x16xi32>
    %c0_i32_22 = arith.constant 0 : i32
    %41 = vector.broadcast %c0_i32_22 : i32 to vector<2x16xi32>
    %42 = arith.cmpi sge, %22, %41 : vector<2x16xi32>
    %43 = arith.andi %40, %42 : vector<2x16xi1>
    %c0_i32_23 = arith.constant 0 : i32
    %44 = arith.addi %c0_i32_23, %28 : i32
    %45 = vector.broadcast %44 : i32 to vector<2x16xi32>
    %46 = arith.cmpi slt, %22, %45 : vector<2x16xi32>
    %47 = arith.andi %43, %46 : vector<2x16xi1>
    %48 = vector.broadcast %38 : f32 to vector<2x16xf32>
    %49 = arith.select %47, %48, %25 : vector<2x16xi1>, vector<2x16xf32>
    %c1 = arith.constant 1 : index
    %50 = memref.load %arg1[%c1] : memref<2xi32, #tpu.memory_space<smem>>
    %c-1_i32_24 = arith.constant -1 : i32
    %51 = arith.cmpi eq, %50, %c-1_i32_24 : i32
    %c8_i32_25 = arith.constant 8 : i32
    %52 = arith.select %51, %c8_i32_25, %50 : i32
    %c1_i32_26 = arith.constant 1 : i32
    %53 = vector.broadcast %c1_i32_26 : i32 to vector<2x8x8xi32>
    %54 = arith.cmpi eq, %21, %53 : vector<2x8x8xi32>
    %55 = vector.broadcast %52 : i32 to vector<2x8x8xi32>
    %56 = arith.cmpi sge, %20, %55 : vector<2x8x8xi32>
    %57 = arith.andi %54, %56 : vector<2x8x8xi1>
    %cst_27 = arith.constant -1.000000e+30 : f32
    %58 = vector.broadcast %cst_27 : f32 to vector<2x8x8xf32>
    %59 = arith.select %57, %58, %35 : vector<2x8x8xi1>, vector<2x8x8xf32>
    %c1_i32_28 = arith.constant 1 : i32
    %60 = arith.maxsi %52, %c1_i32_28 : i32
    %61 = arith.sitofp %60 : i32 to f32
    %cst_29 = arith.constant 1.000000e+00 : f32
    %62 = arith.divf %cst_29, %61 : f32
    %c1_i32_30 = arith.constant 1 : i32
    %63 = vector.broadcast %c1_i32_30 : i32 to vector<2x16xi32>
    %64 = arith.cmpi eq, %23, %63 : vector<2x16xi32>
    %c8_i32_31 = arith.constant 8 : i32
    %65 = vector.broadcast %c8_i32_31 : i32 to vector<2x16xi32>
    %66 = arith.cmpi sge, %22, %65 : vector<2x16xi32>
    %67 = arith.andi %64, %66 : vector<2x16xi1>
    %c8_i32_32 = arith.constant 8 : i32
    %68 = arith.addi %c8_i32_32, %52 : i32
    %69 = vector.broadcast %68 : i32 to vector<2x16xi32>
    %70 = arith.cmpi slt, %22, %69 : vector<2x16xi32>
    %71 = arith.andi %67, %70 : vector<2x16xi1>
    %72 = vector.broadcast %62 : f32 to vector<2x16xf32>
    %73 = arith.select %71, %72, %49 : vector<2x16xi1>, vector<2x16xf32>
    "tpu.trace_start"() <{level = 10 : i32, message = "bqd,bkd->bqk"}> : () -> ()
    %cst_33 = arith.constant dense<0.000000e+00> : vector<2x8x8xf32>
    %74 = tpu.matmul %7, %13, %cst_33 {dimension_numbers = #tpu.dot_dimension_numbers<[2], [2], [1], [1], [0, 0, 0, 1, 1, 1], [0], [0]>} : vector<2x8x16xf32>, vector<2x8x16xf32>, vector<2x8x8xf32> -> vector<2x8x8xf32>
    "tpu.trace_stop"() : () -> ()
    %cst_34 = arith.constant 2.500000e-01 : f32
    %75 = vector.broadcast %cst_34 : f32 to vector<2x8x8xf32>
    %76 = arith.mulf %74, %75 : vector<2x8x8xf32>
    %77 = arith.addf %76, %59 : vector<2x8x8xf32>
    %cst_35 = arith.constant dense<0xFF800000> : vector<2x8xf32>
    %78 = vector.multi_reduction <maximumf>, %77, %cst_35 [2] : vector<2x8x8xf32> to vector<2x8xf32>
    %79 = vector.shape_cast %78 : vector<2x8xf32> to vector<2x8x1xf32>
    %80 = vector.broadcast %79 : vector<2x8x1xf32> to vector<2x8x8xf32>
    %81 = arith.subf %77, %80 : vector<2x8x8xf32>
    %82 = math.exp %81 : vector<2x8x8xf32>
    %cst_36 = arith.constant dense<0.000000e+00> : vector<2x8xf32>
    %83 = vector.multi_reduction <add>, %82, %cst_36 [2] : vector<2x8x8xf32> to vector<2x8xf32>
    %84 = vector.shape_cast %83 : vector<2x8xf32> to vector<2x8x1xf32>
    %85 = tpu.reciprocal %84 {approx = true} : vector<2x8x1xf32> -> vector<2x8x1xf32>
    %86 = vector.broadcast %85 : vector<2x8x1xf32> to vector<2x8x8xf32>
    %87 = arith.mulf %82, %86 : vector<2x8x8xf32>
    "tpu.trace_start"() <{level = 10 : i32, message = "bqk,bkd->bqd"}> : () -> ()
    %cst_37 = arith.constant dense<0.000000e+00> : vector<2x8x16xf32>
    %88 = tpu.matmul %87, %19, %cst_37 {dimension_numbers = #tpu.dot_dimension_numbers<[2], [1], [1], [2], [0, 0, 0, 1, 1, 2], [0], [0]>} : vector<2x8x8xf32>, vector<2x8x16xf32>, vector<2x8x16xf32> -> vector<2x8x16xf32>
    "tpu.trace_stop"() : () -> ()
    %89 = vector.shape_cast %88 : vector<2x8x16xf32> to vector<16x16xf32>
    %c0_38 = arith.constant 0 : index
    %c0_39 = arith.constant 0 : index
    %90 = vector.load %arg9[%c0_38, %c0_39] : memref<16x16xf32, #tpu.memory_space<vmem>>, vector<16x16xf32>
    %cst_40 = arith.constant dense<0.000000e+00> : vector<16x16xf32>
    %91 = tpu.matmul %89, %90, %cst_40 {dimension_numbers = #tpu.dot_dimension_numbers<[1], [0], [0], [1], [0, 0, 1, 1], [], []>} : vector<16x16xf32>, vector<16x16xf32>, vector<16x16xf32> -> vector<16x16xf32>
    %c0_41 = arith.constant 0 : index
    %c0_42 = arith.constant 0 : index
    %92 = vector.load %arg10[%c0_41, %c0_42] : memref<1x16xf32, #tpu.memory_space<vmem>>, vector<1x16xf32>
    %93 = vector.broadcast %92 : vector<1x16xf32> to vector<16x16xf32>
    %94 = arith.addf %91, %93 : vector<16x16xf32>
    %cst_43 = arith.constant dense<0.000000e+00> : vector<16xf32>
    %95 = vector.multi_reduction <add>, %94, %cst_43 [1] : vector<16x16xf32> to vector<16xf32>
    %96 = vector.shape_cast %95 : vector<16xf32> to vector<16x1xf32>
    %cst_44 = arith.constant 1.600000e+01 : f32
    %97 = vector.broadcast %cst_44 : f32 to vector<16x1xf32>
    %98 = arith.divf %96, %97 : vector<16x1xf32>
    %99 = vector.broadcast %98 : vector<16x1xf32> to vector<16x16xf32>
    %100 = arith.subf %94, %99 : vector<16x16xf32>
    %101 = arith.mulf %100, %100 : vector<16x16xf32>
    %cst_45 = arith.constant dense<0.000000e+00> : vector<16xf32>
    %102 = vector.multi_reduction <add>, %101, %cst_45 [1] : vector<16x16xf32> to vector<16xf32>
    %103 = vector.shape_cast %102 : vector<16xf32> to vector<16x1xf32>
    %cst_46 = arith.constant 1.600000e+01 : f32
    %104 = vector.broadcast %cst_46 : f32 to vector<16x1xf32>
    %105 = arith.divf %103, %104 : vector<16x1xf32>
    %106 = vector.broadcast %98 : vector<16x1xf32> to vector<16x16xf32>
    %107 = arith.subf %94, %106 : vector<16x16xf32>
    %cst_47 = arith.constant 9.99999974E-6 : f32
    %108 = vector.broadcast %cst_47 : f32 to vector<16x1xf32>
    %109 = arith.addf %105, %108 : vector<16x1xf32>
    %110 = math.rsqrt %109 : vector<16x1xf32>
    %111 = vector.broadcast %110 : vector<16x1xf32> to vector<16x16xf32>
    %112 = arith.mulf %107, %111 : vector<16x16xf32>
    %c0_48 = arith.constant 0 : index
    %c0_49 = arith.constant 0 : index
    %113 = vector.load %arg11[%c0_48, %c0_49] : memref<1x16xf32, #tpu.memory_space<vmem>>, vector<1x16xf32>
    %114 = vector.broadcast %113 : vector<1x16xf32> to vector<16x16xf32>
    %115 = arith.mulf %112, %114 : vector<16x16xf32>
    %c0_50 = arith.constant 0 : index
    %c0_51 = arith.constant 0 : index
    %116 = vector.load %arg12[%c0_50, %c0_51] : memref<1x16xf32, #tpu.memory_space<vmem>>, vector<1x16xf32>
    %117 = vector.broadcast %116 : vector<1x16xf32> to vector<16x16xf32>
    %118 = arith.addf %115, %117 : vector<16x16xf32>
    %119 = arith.addf %1, %118 : vector<16x16xf32>
    %cst_52 = arith.constant dense<0.000000e+00> : vector<2x16xf32>
    %120 = tpu.matmul %73, %119, %cst_52 {dimension_numbers = #tpu.dot_dimension_numbers<[1], [0], [0], [1], [0, 0, 1, 1], [], []>} : vector<2x16xf32>, vector<16x16xf32>, vector<2x16xf32> -> vector<2x16xf32>
    %c0_53 = arith.constant 0 : index
    %c0_54 = arith.constant 0 : index
    %121 = vector.load %arg13[%c0_53, %c0_54] : memref<16x64xf32, #tpu.memory_space<vmem>>, vector<16x64xf32>
    %cst_55 = arith.constant dense<0.000000e+00> : vector<2x64xf32>
    %122 = tpu.matmul %120, %121, %cst_55 {dimension_numbers = #tpu.dot_dimension_numbers<[1], [0], [0], [1], [0, 0, 1, 1], [], []>} : vector<2x16xf32>, vector<16x64xf32>, vector<2x64xf32> -> vector<2x64xf32>
    %c0_56 = arith.constant 0 : index
    %c0_57 = arith.constant 0 : index
    %123 = vector.load %arg14[%c0_56, %c0_57] : memref<1x64xf32, #tpu.memory_space<vmem>>, vector<1x64xf32>
    %124 = vector.broadcast %123 : vector<1x64xf32> to vector<2x64xf32>
    %125 = arith.addf %122, %124 : vector<2x64xf32>
    %cst_58 = arith.constant 0.000000e+00 : f32
    %126 = vector.broadcast %cst_58 : f32 to vector<2x64xf32>
    %127 = arith.maximumf %125, %126 : vector<2x64xf32>
    %c0_59 = arith.constant 0 : index
    %c0_60 = arith.constant 0 : index
    %128 = vector.load %arg15[%c0_59, %c0_60] : memref<64x32xf32, #tpu.memory_space<vmem>>, vector<64x32xf32>
    %cst_61 = arith.constant dense<0.000000e+00> : vector<2x32xf32>
    %129 = tpu.matmul %127, %128, %cst_61 {dimension_numbers = #tpu.dot_dimension_numbers<[1], [0], [0], [1], [0, 0, 1, 1], [], []>} : vector<2x64xf32>, vector<64x32xf32>, vector<2x32xf32> -> vector<2x32xf32>
    %c0_62 = arith.constant 0 : index
    %c0_63 = arith.constant 0 : index
    %130 = vector.load %arg16[%c0_62, %c0_63] : memref<1x32xf32, #tpu.memory_space<vmem>>, vector<1x32xf32>
    %131 = vector.broadcast %130 : vector<1x32xf32> to vector<2x32xf32>
    %132 = arith.addf %129, %131 : vector<2x32xf32>
    %cst_64 = arith.constant 0.000000e+00 : f32
    %133 = vector.broadcast %cst_64 : f32 to vector<2x32xf32>
    %134 = arith.maximumf %132, %133 : vector<2x32xf32>
    %c0_65 = arith.constant 0 : index
    %c0_66 = arith.constant 0 : index
    %135 = vector.load %arg17[%c0_65, %c0_66] : memref<32x4xf32, #tpu.memory_space<vmem>>, vector<32x4xf32>
    %cst_67 = arith.constant dense<0.000000e+00> : vector<2x4xf32>
    %136 = tpu.matmul %134, %135, %cst_67 {dimension_numbers = #tpu.dot_dimension_numbers<[1], [0], [0], [1], [0, 0, 1, 1], [], []>} : vector<2x32xf32>, vector<32x4xf32>, vector<2x4xf32> -> vector<2x4xf32>
    %c0_68 = arith.constant 0 : index
    %c0_69 = arith.constant 0 : index
    %137 = vector.load %arg18[%c0_68, %c0_69] : memref<1x4xf32, #tpu.memory_space<vmem>>, vector<1x4xf32>
    %138 = vector.broadcast %137 : vector<1x4xf32> to vector<2x4xf32>
    %139 = arith.addf %136, %138 : vector<2x4xf32>
    %c0_70 = arith.constant 0 : index
    %c0_71 = arith.constant 0 : index
    %140 = vector.load %arg19[%c0_70, %c0_71] : memref<2x4xf32, #tpu.memory_space<vmem>>, vector<2x4xf32>
    tpu.vector_store %arg19[%c0_70, %c0_71], %139 {strides = array<i32>} : memref<2x4xf32, #tpu.memory_space<vmem>>, vector<2x4xf32>,
    return
  }
  func.func @transform_0(%arg0: i32, %arg1: memref<2xi32, #tpu.memory_space<smem>>) -> (i32, i32, i32) {
    %c0_i32 = arith.constant 0 : i32
    %c0_i32_0 = arith.constant 0 : i32
    %c0_i32_1 = arith.constant 0 : i32
    %c0_i32_2 = arith.constant 0 : i32
    return %c0_i32, %c0_i32_0, %c0_i32_1 : i32, i32, i32
  }
  func.func @transform_1(%arg0: i32, %arg1: memref<2xi32, #tpu.memory_space<smem>>) -> (i32, i32) {
    %c0_i32 = arith.constant 0 : i32
    %c0_i32_0 = arith.constant 0 : i32
    %c0_i32_1 = arith.constant 0 : i32
    return %c0_i32, %c0_i32_0 : i32, i32
  }
  func.func @transform_2(%arg0: i32, %arg1: memref<2xi32, #tpu.memory_space<smem>>) -> (i32, i32) {
    %c0_i32 = arith.constant 0 : i32
    %c0_i32_0 = arith.constant 0 : i32
    %c0_i32_1 = arith.constant 0 : i32
    return %c0_i32, %c0_i32_0 : i32, i32
  }
  func.func @transform_3(%arg0: i32, %arg1: memref<2xi32, #tpu.memory_space<smem>>) -> (i32, i32) {
    %c0_i32 = arith.constant 0 : i32
    %c0_i32_0 = arith.constant 0 : i32
    %c0_i32_1 = arith.constant 0 : i32
    return %c0_i32, %c0_i32_0 : i32, i32
  }
  func.func @transform_4(%arg0: i32, %arg1: memref<2xi32, #tpu.memory_space<smem>>) -> (i32, i32) {
    %c0_i32 = arith.constant 0 : i32
    %c0_i32_0 = arith.constant 0 : i32
    %c0_i32_1 = arith.constant 0 : i32
    return %c0_i32, %c0_i32_0 : i32, i32
  }
  func.func @transform_5(%arg0: i32, %arg1: memref<2xi32, #tpu.memory_space<smem>>) -> (i32, i32) {
    %c0_i32 = arith.constant 0 : i32
    %c0_i32_0 = arith.constant 0 : i32
    %c0_i32_1 = arith.constant 0 : i32
    return %c0_i32, %c0_i32_0 : i32, i32
  }
  func.func @transform_6(%arg0: i32, %arg1: memref<2xi32, #tpu.memory_space<smem>>) -> (i32, i32) {
    %c0_i32 = arith.constant 0 : i32
    %c0_i32_0 = arith.constant 0 : i32
    %c0_i32_1 = arith.constant 0 : i32
    return %c0_i32, %c0_i32_0 : i32, i32
  }
  func.func @transform_7(%arg0: i32, %arg1: memref<2xi32, #tpu.memory_space<smem>>) -> (i32, i32) {
    %c0_i32 = arith.constant 0 : i32
    %c0_i32_0 = arith.constant 0 : i32
    %c0_i32_1 = arith.constant 0 : i32
    return %c0_i32, %c0_i32_0 : i32, i32
  }
  func.func @transform_8(%arg0: i32, %arg1: memref<2xi32, #tpu.memory_space<smem>>) -> (i32, i32) {
    %c0_i32 = arith.constant 0 : i32
    %c0_i32_0 = arith.constant 0 : i32
    %c0_i32_1 = arith.constant 0 : i32
    return %c0_i32, %c0_i32_0 : i32, i32
  }
  func.func @transform_9(%arg0: i32, %arg1: memref<2xi32, #tpu.memory_space<smem>>) -> (i32, i32) {
    %c0_i32 = arith.constant 0 : i32
    %c0_i32_0 = arith.constant 0 : i32
    %c0_i32_1 = arith.constant 0 : i32
    return %c0_i32, %c0_i32_0 : i32, i32
  }
  func.func @transform_10(%arg0: i32, %arg1: memref<2xi32, #tpu.memory_space<smem>>) -> (i32, i32) {
    %c0_i32 = arith.constant 0 : i32
    %c0_i32_0 = arith.constant 0 : i32
    %c0_i32_1 = arith.constant 0 : i32
    return %c0_i32, %c0_i32_0 : i32, i32
  }
  func.func @transform_11(%arg0: i32, %arg1: memref<2xi32, #tpu.memory_space<smem>>) -> (i32, i32) {
    %c0_i32 = arith.constant 0 : i32
    %c0_i32_0 = arith.constant 0 : i32
    %c0_i32_1 = arith.constant 0 : i32
    return %c0_i32, %c0_i32_0 : i32, i32
  }
  func.func @transform_12(%arg0: i32, %arg1: memref<2xi32, #tpu.memory_space<smem>>) -> (i32, i32) {
    %c0_i32 = arith.constant 0 : i32
    %c0_i32_0 = arith.constant 0 : i32
    %c0_i32_1 = arith.constant 0 : i32
    return %c0_i32, %c0_i32_0 : i32, i32
  }
  func.func @transform_13(%arg0: i32, %arg1: memref<2xi32, #tpu.memory_space<smem>>) -> (i32, i32) {
    %c0_i32 = arith.constant 0 : i32
    %c0_i32_0 = arith.constant 0 : i32
    %c0_i32_1 = arith.constant 0 : i32
    return %c0_i32, %c0_i32_0 : i32, i32
  }
  func.func @transform_14(%arg0: i32, %arg1: memref<2xi32, #tpu.memory_space<smem>>) -> (i32, i32) {
    %c0_i32 = arith.constant 0 : i32
    %c0_i32_0 = arith.constant 0 : i32
    %c0_i32_1 = arith.constant 0 : i32
    return %c0_i32, %c0_i32_0 : i32, i32
  }
  func.func @transform_15(%arg0: i32, %arg1: memref<2xi32, #tpu.memory_space<smem>>) -> (i32, i32) {
    %c0_i32 = arith.constant 0 : i32
    %c0_i32_0 = arith.constant 0 : i32
    %c0_i32_1 = arith.constant 0 : i32
    return %c0_i32, %c0_i32_0 : i32, i32
  }
  func.func @transform_16(%arg0: i32, %arg1: memref<2xi32, #tpu.memory_space<smem>>) -> (i32, i32) {
    %c0_i32 = arith.constant 0 : i32
    %c0_i32_0 = arith.constant 0 : i32
    %c0_i32_1 = arith.constant 0 : i32
    return %c0_i32, %c0_i32_0 : i32, i32
  }
  func.func @transform_17(%arg0: i32, %arg1: memref<2xi32, #tpu.memory_space<smem>>) -> (i32, i32) {
    %c0_i32 = arith.constant 0 : i32
    %c0_i32_0 = arith.constant 0 : i32
    %c0_i32_1 = arith.constant 0 : i32
    return %c0_i32, %c0_i32_0 : i32, i32
  }
}

</mosaic_0001>

<llo_original>
// kernel: tpu_custom_call.1
$region0: #{tpu_custom_call.1}
  #allocation0 [shape = 'u32[]', space=smem, size = 0x4, offset = 0x4, fixed_abs, tag = 'smem constant byte address 0x4 - core index']
  #allocation1 [shape = 'u32[144,128]{1,0:T(1,128)}', space=vmem, size = 0x12000, scoped, tag = 'internal scratch']
  #allocation2 [shape = 's32[1]{0}', space=sflag, size = 0x4, scoped, tag = 'scoped memory for tpu_custom_call.1']
  #allocation3 [shape = 'u8[512]{0}', space=smem, size = 0x200, scoped, tag = 'prefetched SMEM operand 0']
  %s0 = inlined_call_operand.vmem [shape: s32[2], index: 0, kind: input, shape index: {}]
  %s1 = inlined_call_operand.vmem [shape: f32[2,8,16], index: 1, kind: input, shape index: {}]
  %s2 = inlined_call_operand.vmem [shape: f32[16,16], index: 2, kind: input, shape index: {}]
  %s3 = inlined_call_operand.vmem [shape: f32[16,16], index: 3, kind: input, shape index: {}]
  %s4 = inlined_call_operand.vmem [shape: f32[16,16], index: 4, kind: input, shape index: {}]
  %s5 = inlined_call_operand.vmem [shape: f32[1,16], index: 5, kind: input, shape index: {}]
  %s6 = inlined_call_operand.vmem [shape: f32[1,16], index: 6, kind: input, shape index: {}]
  %s7 = inlined_call_operand.vmem [shape: f32[1,16], index: 7, kind: input, shape index: {}]
  %s8 = inlined_call_operand.vmem [shape: f32[16,16], index: 8, kind: input, shape index: {}]
  %s9 = inlined_call_operand.vmem [shape: f32[1,16], index: 9, kind: input, shape index: {}]
  %s10 = inlined_call_operand.vmem [shape: f32[1,16], index: 10, kind: input, shape index: {}]
  %s11 = inlined_call_operand.vmem [shape: f32[1,16], index: 11, kind: input, shape index: {}]
  %s12 = inlined_call_operand.vmem [shape: f32[16,64], index: 12, kind: input, shape index: {}]
  %s13 = inlined_call_operand.vmem [shape: f32[1,64], index: 13, kind: input, shape index: {}]
  %s14 = inlined_call_operand.vmem [shape: f32[64,32], index: 14, kind: input, shape index: {}]
  %s15 = inlined_call_operand.vmem [shape: f32[1,32], index: 15, kind: input, shape index: {}]
  %s16 = inlined_call_operand.vmem [shape: f32[32,4], index: 16, kind: input, shape index: {}]
  %s17 = inlined_call_operand.vmem [shape: f32[1,4], index: 17, kind: input, shape index: {}]
  %s18 = inlined_call_operand.hbm [shape: f32[2,4], index: 18, kind: output, shape index: {}]
  %s19 = sld [smem:[#allocation0]]
  $region78: #{tpu_custom_call.1} parent=0
    _
  %s21 = ssub.s32 1, %s19
  %s22 = scalar_select 0, %s21, %s19
  %s23 = sshll.u32 %s0, 4
  %s24 = int_to_ptr.vmem [resolvable:$true] %s23
  %26 = dma.vmem_to_smem %s24, 16, [#allocation3], [#allocation2]
  %27 = dma.done [#allocation2], 16
  %28 = sfence
  $region1: #{tpu_custom_call.1} parent=0
    #allocation4 [shape = 'u8[1024]{0}', space=vmem, size = 0x400, scoped, tag = 'output window, operand 0, single buffered']
    #allocation5 [shape = 's32[1]{0}', space=sflag, size = 0x4, scoped, tag = 'scoped memory for tpu_custom_call.1']
    %29 = vsyncpa [#allocation5], 0
    // Predicated region
    $region2: #{tpu_custom_call.1} parent=1 // pred_check
      _
    $region3: #{tpu_custom_call.1} parent=1 // pred_check_branch
      %31 = sbr.rel (0) target = $region5
    $region4: #{tpu_custom_call.1} parent=1 // pred_region
      _
    $region5: #{tpu_custom_call.1} parent=1 // pred_fallthru
      _
    // Predicated region
    $region6: #{tpu_custom_call.1} parent=1 // pred_check
      _
    $region7: #{tpu_custom_call.1} parent=1 // pred_check_branch
      %33 = sbr.rel (0) target = $region9
    $region8: #{tpu_custom_call.1} parent=1 // pred_region
      _
    $region9: #{tpu_custom_call.1} parent=1 // pred_fallthru
      _
    // Predicated region
    $region10: #{tpu_custom_call.1} parent=1 // pred_check
      _
    $region11: #{tpu_custom_call.1} parent=1 // pred_check_branch
      %35 = sbr.rel (0) target = $region13
    $region12: #{tpu_custom_call.1} parent=1 // pred_region
      _
    $region13: #{tpu_custom_call.1} parent=1 // pred_fallthru
      _
    // Predicated region
    $region14: #{tpu_custom_call.1} parent=1 // pred_check
      _
    $region15: #{tpu_custom_call.1} parent=1 // pred_check_branch
      %37 = sbr.rel (0) target = $region17
    $region16: #{tpu_custom_call.1} parent=1 // pred_region
      _
    $region17: #{tpu_custom_call.1} parent=1 // pred_fallthru
      _
    // Predicated region
    $region18: #{tpu_custom_call.1} parent=1 // pred_check
      _
    $region19: #{tpu_custom_call.1} parent=1 // pred_check_branch
      %39 = sbr.rel (0) target = $region21
    $region20: #{tpu_custom_call.1} parent=1 // pred_region
      _
    $region21: #{tpu_custom_call.1} parent=1 // pred_fallthru
      _
    // Predicated region
    $region22: #{tpu_custom_call.1} parent=1 // pred_check
      _
    $region23: #{tpu_custom_call.1} parent=1 // pred_check_branch
      %41 = sbr.rel (0) target = $region25
    $region24: #{tpu_custom_call.1} parent=1 // pred_region
      _
    $region25: #{tpu_custom_call.1} parent=1 // pred_fallthru
      _
    // Predicated region
    $region26: #{tpu_custom_call.1} parent=1 // pred_check
      _
    $region27: #{tpu_custom_call.1} parent=1 // pred_check_branch
      %43 = sbr.rel (0) target = $region29
    $region28: #{tpu_custom_call.1} parent=1 // pred_region
      _
    $region29: #{tpu_custom_call.1} parent=1 // pred_fallthru
      _
    // Predicated region
    $region30: #{tpu_custom_call.1} parent=1 // pred_check
      _
    $region31: #{tpu_custom_call.1} parent=1 // pred_check_branch
      %45 = sbr.rel (0) target = $region33
    $region32: #{tpu_custom_call.1} parent=1 // pred_region
      _
    $region33: #{tpu_custom_call.1} parent=1 // pred_fallthru
      _
    // Predicated region
    $region34: #{tpu_custom_call.1} parent=1 // pred_check
      _
    $region35: #{tpu_custom_call.1} parent=1 // pred_check_branch
      %47 = sbr.rel (0) target = $region37
    $region36: #{tpu_custom_call.1} parent=1 // pred_region
      _
    $region37: #{tpu_custom_call.1} parent=1 // pred_fallthru
      _
    // Predicated region
    $region38: #{tpu_custom_call.1} parent=1 // pred_check
      _
    $region39: #{tpu_custom_call.1} parent=1 // pred_check_branch
      %49 = sbr.rel (0) target = $region41
    $region40: #{tpu_custom_call.1} parent=1 // pred_region
      _
    $region41: #{tpu_custom_call.1} parent=1 // pred_fallthru
      _
    // Predicated region
    $region42: #{tpu_custom_call.1} parent=1 // pred_check
      _
    $region43: #{tpu_custom_call.1} parent=1 // pred_check_branch
      %51 = sbr.rel (0) target = $region45
    $region44: #{tpu_custom_call.1} parent=1 // pred_region
      _
    $region45: #{tpu_custom_call.1} parent=1 // pred_fallthru
      _
    // Predicated region
    $region46: #{tpu_custom_call.1} parent=1 // pred_check
      _
    $region47: #{tpu_custom_call.1} parent=1 // pred_check_branch
      %53 = sbr.rel (0) target = $region49
    $region48: #{tpu_custom_call.1} parent=1 // pred_region
      _
    $region49: #{tpu_custom_call.1} parent=1 // pred_fallthru
      _
    // Predicated region
    $region50: #{tpu_custom_call.1} parent=1 // pred_check
      _
    $region51: #{tpu_custom_call.1} parent=1 // pred_check_branch
      %55 = sbr.rel (0) target = $region53
    $region52: #{tpu_custom_call.1} parent=1 // pred_region
      _
    $region53: #{tpu_custom_call.1} parent=1 // pred_fallthru
      _
    // Predicated region
    $region54: #{tpu_custom_call.1} parent=1 // pred_check
      _
    $region55: #{tpu_custom_call.1} parent=1 // pred_check_branch
      %57 = sbr.rel (0) target = $region57
    $region56: #{tpu_custom_call.1} parent=1 // pred_region
      _
    $region57: #{tpu_custom_call.1} parent=1 // pred_fallthru
      _
    // Predicated region
    $region58: #{tpu_custom_call.1} parent=1 // pred_check
      _
    $region59: #{tpu_custom_call.1} parent=1 // pred_check_branch
      %59 = sbr.rel (0) target = $region61
    $region60: #{tpu_custom_call.1} parent=1 // pred_region
      _
    $region61: #{tpu_custom_call.1} parent=1 // pred_fallthru
      _
    // Predicated region
    $region62: #{tpu_custom_call.1} parent=1 // pred_check
      _
    $region63: #{tpu_custom_call.1} parent=1 // pred_check_branch
      %61 = sbr.rel (0) target = $region65
    $region64: #{tpu_custom_call.1} parent=1 // pred_region
      _
    $region65: #{tpu_custom_call.1} parent=1 // pred_fallthru
      _
    // Predicated region
    $region66: #{tpu_custom_call.1} parent=1 // pred_check
      _
    $region67: #{tpu_custom_call.1} parent=1 // pred_check_branch
      %63 = sbr.rel (0) target = $region69
    $region68: #{tpu_custom_call.1} parent=1 // pred_region
      _
    $region69: #{tpu_custom_call.1} parent=1 // pred_fallthru
      _
    %v64 = vld [vmem:[%s1] sm:$0xff]
    %v65 = vld [vmem:[%s1 + $0x8] sm:$0xff]
    %v66 = vld [vmem:[%s2] sm:$0xff]
    %v67 = vld [vmem:[%s2 + $0x8] sm:$0xff]
    %v68 = vld [vmem:[%s5] sm:$0x1]
    %v70 = vlaneseq
    %v71 = vshrl.u32 %v70, 7
    %v72 = vsub.s32 0, %v71
    %v73 = vrot.slane %v68, %v72
    %vm75 = vcmask 130048
    %v77 = vsel %vm75, %v64, 0
    %v80 = vsel %vm75, %v65, 0
    %82 = vmatprep.subr.mxu0 0.0
    %83 = vmatpush1.msra.mxu0 %v66
    %84 = vmatprep.subr.mxu0 0.0
    %85 = vmatpush1.msra.mxu0 %v67
    %86 = vmatprep.subr.mxu0 0.0
    %87 = vmatpush1.msra.mxu0 0.0
    %88 = vmatprep.subr.mxu0 0.0
    %89 = vmatpush1.msra.mxu0 0.0
    %90 = vmatprep.subr.mxu0 0.0
    %91 = vmatpush1.msra.mxu0 0.0
    %92 = vmatprep.subr.mxu0 0.0
    %93 = vmatpush1.msra.mxu0 0.0
    %94 = vmatprep.subr.mxu0 0.0
    %95 = vmatpush1.msra.mxu0 0.0
    %96 = vmatprep.subr.mxu0 0.0
    %97 = vmatpush1.msra.mxu0 0.0
    %98 = vmatprep.subr.mxu0 0.0
    %99 = vmatpush1.msra.mxu0 0.0
    %100 = vmatprep.subr.mxu0 0.0
    %101 = vmatpush1.msra.mxu0 0.0
    %102 = vmatprep.subr.mxu0 0.0
    %103 = vmatpush1.msra.mxu0 0.0
    %104 = vmatprep.subr.mxu0 0.0
    %105 = vmatpush1.msra.mxu0 0.0
    %106 = vmatprep.subr.mxu0 0.0
    %107 = vmatpush1.msra.mxu0 0.0
    %108 = vmatprep.subr.mxu0 0.0
    %109 = vmatpush1.msra.mxu0 0.0
    %110 = vmatprep.subr.mxu0 0.0
    %111 = vmatpush1.msra.mxu0 0.0
    %112 = vmatprep.subr.mxu0 0.0
    %113 = vmatpush1.msra.mxu0 0.0
    %114 = vmatprep.subr.mxu0 0.0
    %115 = vmatpush1.msra.mxu0 0.0
    %116 = vmatprep.subr.mxu0 0.0
    %117 = vmatpush1.msra.mxu0 0.0
    %118 = vmatprep.subr.mxu0 0.0
    %119 = vmatpush1.msra.mxu0 0.0
    %120 = vmatprep.subr.mxu0 0.0
    %121 = vmatpush1.msra.mxu0 0.0
    %122 = vmatprep.subr.mxu0 0.0
    %123 = vmatpush1.msra.mxu0 0.0
    %124 = vmatprep.subr.mxu0 0.0
    %125 = vmatpush1.msra.mxu0 0.0
    %126 = vmatprep.subr.mxu0 0.0
    %127 = vmatpush1.msra.mxu0 0.0
    %128 = vmatprep.subr.mxu0 0.0
    %129 = vmatpush1.msra.mxu0 0.0
    %130 = vmatprep.subr.mxu0 0.0
    %131 = vmatpush1.msra.mxu0 0.0
    %132 = vmatprep.subr.mxu0 0.0
    %133 = vmatpush1.msra.mxu0 0.0
    %134 = vmatprep.subr.mxu0 0.0
    %135 = vmatpush1.msra.mxu0 0.0
    %136 = vmatprep.subr.mxu0 0.0
    %137 = vmatpush1.msra.mxu0 0.0
    %138 = vmatprep.subr.mxu0 0.0
    %139 = vmatpush1.msra.mxu0 0.0
    %140 = vmatprep.subr.mxu0 0.0
    %141 = vmatpush1.msra.mxu0 0.0
    %142 = vmatprep.subr.mxu0 0.0
    %143 = vmatpush1.msra.mxu0 0.0
    %144 = vmatprep.subr.mxu0 0.0
    %145 = vmatpush1.msra.mxu0 0.0
    %146 = vmatprep.mubr.f32.mxu0 0.0
    %147 = vmatmul.mubr.f32.gmra.mrb[0].mxu0 %v77
    %v148 = vpop.f32.mrb[0].mxu0
    %v149 = vadd.f32 %v73, %v148
    %v150 = vpop.f32.mrb[0].mxu0
    %151 = vmatprep.mubr.f32.mxu0 0.0
    %152 = vmatmul.mubr.f32.gmra.mrb[0].mxu0 %v80
    %v153 = vpop.f32.mrb[0].mxu0
    %v154 = vadd.f32 %v73, %v153
    %v155 = vpop.f32.mrb[0].mxu0
    %156 = vdwg.mxu0
    %v157 = vld [vmem:[%s3] sm:$0xff]
    %v158 = vld [vmem:[%s3 + $0x8] sm:$0xff]
    %v159 = vld [vmem:[%s6] sm:$0x1]
    %v161 = vlaneseq
    %v162 = vshrl.u32 %v161, 7
    %v163 = vsub.s32 0, %v162
    %v164 = vrot.slane %v159, %v163
    %166 = vmatprep.subr.mxu0 0.0
    %167 = vmatpush1.msra.mxu0 %v157
    %168 = vmatprep.subr.mxu0 0.0
    %169 = vmatpush1.msra.mxu0 %v158
    %170 = vmatprep.subr.mxu0 0.0
    %171 = vmatpush1.msra.mxu0 0.0
    %172 = vmatprep.subr.mxu0 0.0
    %173 = vmatpush1.msra.mxu0 0.0
    %174 = vmatprep.subr.mxu0 0.0
    %175 = vmatpush1.msra.mxu0 0.0
    %176 = vmatprep.subr.mxu0 0.0
    %177 = vmatpush1.msra.mxu0 0.0
    %178 = vmatprep.subr.mxu0 0.0
    %179 = vmatpush1.msra.mxu0 0.0
    %180 = vmatprep.subr.mxu0 0.0
    %181 = vmatpush1.msra.mxu0 0.0
    %182 = vmatprep.subr.mxu0 0.0
    %183 = vmatpush1.msra.mxu0 0.0
    %184 = vmatprep.subr.mxu0 0.0
    %185 = vmatpush1.msra.mxu0 0.0
    %186 = vmatprep.subr.mxu0 0.0
    %187 = vmatpush1.msra.mxu0 0.0
    %188 = vmatprep.subr.mxu0 0.0
    %189 = vmatpush1.msra.mxu0 0.0
    %190 = vmatprep.subr.mxu0 0.0
    %191 = vmatpush1.msra.mxu0 0.0
    %192 = vmatprep.subr.mxu0 0.0
    %193 = vmatpush1.msra.mxu0 0.0
    %194 = vmatprep.subr.mxu0 0.0
    %195 = vmatpush1.msra.mxu0 0.0
    %196 = vmatprep.subr.mxu0 0.0
    %197 = vmatpush1.msra.mxu0 0.0
    %198 = vmatprep.subr.mxu0 0.0
    %199 = vmatpush1.msra.mxu0 0.0
    %200 = vmatprep.subr.mxu0 0.0
    %201 = vmatpush1.msra.mxu0 0.0
    %202 = vmatprep.subr.mxu0 0.0
    %203 = vmatpush1.msra.mxu0 0.0
    %204 = vmatprep.subr.mxu0 0.0
    %205 = vmatpush1.msra.mxu0 0.0
    %206 = vmatprep.subr.mxu0 0.0
    %207 = vmatpush1.msra.mxu0 0.0
    %208 = vmatprep.subr.mxu0 0.0
    %209 = vmatpush1.msra.mxu0 0.0
    %210 = vmatprep.subr.mxu0 0.0
    %211 = vmatpush1.msra.mxu0 0.0
    %212 = vmatprep.subr.mxu0 0.0
    %213 = vmatpush1.msra.mxu0 0.0
    %214 = vmatprep.subr.mxu0 0.0
    %215 = vmatpush1.msra.mxu0 0.0
    %216 = vmatprep.subr.mxu0 0.0
    %217 = vmatpush1.msra.mxu0 0.0
    %218 = vmatprep.subr.mxu0 0.0
    %219 = vmatpush1.msra.mxu0 0.0
    %220 = vmatprep.subr.mxu0 0.0
    %221 = vmatpush1.msra.mxu0 0.0
    %222 = vmatprep.subr.mxu0 0.0
    %223 = vmatpush1.msra.mxu0 0.0
    %224 = vmatprep.subr.mxu0 0.0
    %225 = vmatpush1.msra.mxu0 0.0
    %226 = vmatprep.subr.mxu0 0.0
    %227 = vmatpush1.msra.mxu0 0.0
    %228 = vmatprep.subr.mxu0 0.0
    %229 = vmatpush1.msra.mxu0 0.0
    %230 = vmatprep.mubr.f32.mxu0 0.0
    %231 = vmatmul.mubr.f32.gmra.mrb[0].mxu0 %v77
    %v232 = vpop.f32.mrb[0].mxu0
    %v233 = vadd.f32 %v164, %v232
    %v234 = vpop.f32.mrb[0].mxu0
    %235 = vmatprep.mubr.f32.mxu0 0.0
    %236 = vmatmul.mubr.f32.gmra.mrb[0].mxu0 %v80
    %v237 = vpop.f32.mrb[0].mxu0
    %v238 = vadd.f32 %v164, %v237
    %v239 = vpop.f32.mrb[0].mxu0
    %240 = vdwg.mxu0
    %v241 = vld [vmem:[%s4] sm:$0xff]
    %v242 = vld [vmem:[%s4 + $0x8] sm:$0xff]
    %v243 = vld [vmem:[%s7] sm:$0x1]
    %v245 = vlaneseq
    %v246 = vshrl.u32 %v245, 7
    %v247 = vsub.s32 0, %v246
    %v248 = vrot.slane %v243, %v247
    %250 = vmatprep.subr.mxu0 0.0
    %251 = vmatpush1.msra.mxu0 %v241
    %252 = vmatprep.subr.mxu0 0.0
    %253 = vmatpush1.msra.mxu0 %v242
    %254 = vmatprep.subr.mxu0 0.0
    %255 = vmatpush1.msra.mxu0 0.0
    %256 = vmatprep.subr.mxu0 0.0
    %257 = vmatpush1.msra.mxu0 0.0
    %258 = vmatprep.subr.mxu0 0.0
    %259 = vmatpush1.msra.mxu0 0.0
    %260 = vmatprep.subr.mxu0 0.0
    %261 = vmatpush1.msra.mxu0 0.0
    %262 = vmatprep.subr.mxu0 0.0
    %263 = vmatpush1.msra.mxu0 0.0
    %264 = vmatprep.subr.mxu0 0.0
    %265 = vmatpush1.msra.mxu0 0.0
    %266 = vmatprep.subr.mxu0 0.0
    %267 = vmatpush1.msra.mxu0 0.0
    %268 = vmatprep.subr.mxu0 0.0
    %269 = vmatpush1.msra.mxu0 0.0
    %270 = vmatprep.subr.mxu0 0.0
    %271 = vmatpush1.msra.mxu0 0.0
    %272 = vmatprep.subr.mxu0 0.0
    %273 = vmatpush1.msra.mxu0 0.0
    %274 = vmatprep.subr.mxu0 0.0
    %275 = vmatpush1.msra.mxu0 0.0
    %276 = vmatprep.subr.mxu0 0.0
    %277 = vmatpush1.msra.mxu0 0.0
    %278 = vmatprep.subr.mxu0 0.0
    %279 = vmatpush1.msra.mxu0 0.0
    %280 = vmatprep.subr.mxu0 0.0
    %281 = vmatpush1.msra.mxu0 0.0
    %282 = vmatprep.subr.mxu0 0.0
    %283 = vmatpush1.msra.mxu0 0.0
    %284 = vmatprep.subr.mxu0 0.0
    %285 = vmatpush1.msra.mxu0 0.0
    %286 = vmatprep.subr.mxu0 0.0
    %287 = vmatpush1.msra.mxu0 0.0
    %288 = vmatprep.subr.mxu0 0.0
    %289 = vmatpush1.msra.mxu0 0.0
    %290 = vmatprep.subr.mxu0 0.0
    %291 = vmatpush1.msra.mxu0 0.0
    %292 = vmatprep.subr.mxu0 0.0
    %293 = vmatpush1.msra.mxu0 0.0
    %294 = vmatprep.subr.mxu0 0.0
    %295 = vmatpush1.msra.mxu0 0.0
    %296 = vmatprep.subr.mxu0 0.0
    %297 = vmatpush1.msra.mxu0 0.0
    %298 = vmatprep.subr.mxu0 0.0
    %299 = vmatpush1.msra.mxu0 0.0
    %300 = vmatprep.subr.mxu0 0.0
    %301 = vmatpush1.msra.mxu0 0.0
    %302 = vmatprep.subr.mxu0 0.0
    %303 = vmatpush1.msra.mxu0 0.0
    %304 = vmatprep.subr.mxu0 0.0
    %305 = vmatpush1.msra.mxu0 0.0
    %306 = vmatprep.subr.mxu0 0.0
    %307 = vmatpush1.msra.mxu0 0.0
    %308 = vmatprep.subr.mxu0 0.0
    %309 = vmatpush1.msra.mxu0 0.0
    %310 = vmatprep.subr.mxu0 0.0
    %311 = vmatpush1.msra.mxu0 0.0
    %312 = vmatprep.subr.mxu0 0.0
    %313 = vmatpush1.msra.mxu0 0.0
    %314 = vmatprep.mubr.f32.mxu0 0.0
    %315 = vmatmul.mubr.f32.gmra.mrb[0].mxu0 %v77
    %v316 = vpop.f32.mrb[0].mxu0
    %v317 = vadd.f32 %v248, %v316
    %v318 = vpop.f32.mrb[0].mxu0
    %319 = vmatprep.mubr.f32.mxu0 0.0
    %320 = vmatmul.mubr.f32.gmra.mrb[0].mxu0 %v80
    %v321 = vpop.f32.mrb[0].mxu0
    %v322 = vadd.f32 %v248, %v321
    %v323 = vpop.f32.mrb[0].mxu0
    %324 = vdwg.mxu0
    %v325 = vlaneseq
    %v326 = vand.u32 %v325, 127
    %v327 = vlaneseq
    %v328 = vshrl.u32 %v327, 7
    %s329 = sld [smem:[#allocation3]]
    %p330 = scmp.eq.s32.totalorder %s329, 4294967295
    %s331 = scalar_select %p330, 8, %s329
    %v332 = vstv %s331
    %vm333 = vcmp.ge.s32.totalorder %v326, %v332
    %vm334 = vmand 1, %vm333
    %vm335 = vmand 0, %vm333
    %v336 = vsel %vm334, -1e+30, 0.0
    %v337 = vsel %vm335, -1e+30, 0.0
    %p338 = scmp.gt.s32.totalorder %s331, 1
    %s339 = scalar_select %p338, %s331, 1
    %s340 = scvt.s32.f32 %s339
    %v341 = vstv %s340
    %v342 = vrcp.pop %v341
    %s343 = vtos %v342
    %vm344 = vcmp.eq.s32.totalorder %v328, 0
    %vm345 = vcmp.ge.s32.totalorder %v326, 0
    %vm346 = vmand %vm344, %vm345
    %vm347 = vcmp.lt.s32.totalorder %v326, %v332
    %vm348 = vmand %vm346, %vm347
    %v349 = vstv %s343
    %v350 = vsel %vm348, %v349, 0.0
    %s351 = sld [smem:[#allocation3 + $0x1]]
    %p352 = scmp.eq.s32.totalorder %s351, 4294967295
    %s353 = scalar_select %p352, 8, %s351
    %v354 = vstv %s353
    %vm355 = vcmp.ge.s32.totalorder %v326, %v354
    %vm356 = vmand 0, %vm355
    %vm357 = vmand 1, %vm355
    %v358 = vsel %vm356, -1e+30, %v336
    %v359 = vsel %vm357, -1e+30, %v337
    %p360 = scmp.gt.s32.totalorder %s353, 1
    %s361 = scalar_select %p360, %s353, 1
    %s362 = scvt.s32.f32 %s361
    %v363 = vstv %s362
    %v364 = vrcp.pop %v363
    %s365 = vtos %v364
    %vm366 = vcmp.eq.s32.totalorder %v328, 1
    %vm367 = vcmp.ge.s32.totalorder %v326, 8
    %vm368 = vmand %vm366, %vm367
    %s369 = sadd.s32 %s353, 8
    %v370 = vstv %s369
    %vm371 = vcmp.lt.s32.totalorder %v326, %v370
    %vm372 = vmand %vm368, %vm371
    %v373 = vstv %s365
    %v374 = vsel %vm372, %v373, %v350
    %v376 = vsel %vm75, %v149, 0
    %v379 = vsel %vm75, %v233, 0
    %381 = vmatprep.subr.mxu0 0.0
    %382 = vmatpush1.xpose.msra.mxu0 %v379
    %383 = vmatprep.subr.mxu0 0.0
    %384 = vmatpush1.xpose.msra.mxu0 0.0
    %385 = vmatprep.subr.mxu0 0.0
    %386 = vmatpush1.xpose.msra.mxu0 0.0
    %387 = vmatprep.subr.mxu0 0.0
    %388 = vmatpush1.xpose.msra.mxu0 0.0
    %389 = vmatprep.subr.mxu0 0.0
    %390 = vmatpush1.xpose.msra.mxu0 0.0
    %391 = vmatprep.subr.mxu0 0.0
    %392 = vmatpush1.xpose.msra.mxu0 0.0
    %393 = vmatprep.subr.mxu0 0.0
    %394 = vmatpush1.xpose.msra.mxu0 0.0
    %395 = vmatprep.subr.mxu0 0.0
    %396 = vmatpush1.xpose.msra.mxu0 0.0
    %397 = vmatprep.subr.mxu0 0.0
    %398 = vmatpush1.xpose.msra.mxu0 0.0
    %399 = vmatprep.subr.mxu0 0.0
    %400 = vmatpush1.xpose.msra.mxu0 0.0
    %401 = vmatprep.subr.mxu0 0.0
    %402 = vmatpush1.xpose.msra.mxu0 0.0
    %403 = vmatprep.subr.mxu0 0.0
    %404 = vmatpush1.xpose.msra.mxu0 0.0
    %405 = vmatprep.subr.mxu0 0.0
    %406 = vmatpush1.xpose.msra.mxu0 0.0
    %407 = vmatprep.subr.mxu0 0.0
    %408 = vmatpush1.xpose.msra.mxu0 0.0
    %409 = vmatprep.subr.mxu0 0.0
    %410 = vmatpush1.xpose.msra.mxu0 0.0
    %411 = vmatprep.subr.mxu0 0.0
    %412 = vmatpush1.xpose.msra.mxu0 0.0
    %413 = vmatprep.subr.mxu0 0.0
    %414 = vmatpush1.xpose.msra.mxu0 0.0
    %415 = vmatprep.subr.mxu0 0.0
    %416 = vmatpush1.xpose.msra.mxu0 0.0
    %417 = vmatprep.subr.mxu0 0.0
    %418 = vmatpush1.xpose.msra.mxu0 0.0
    %419 = vmatprep.subr.mxu0 0.0
    %420 = vmatpush1.xpose.msra.mxu0 0.0
    %421 = vmatprep.subr.mxu0 0.0
    %422 = vmatpush1.xpose.msra.mxu0 0.0
    %423 = vmatprep.subr.mxu0 0.0
    %424 = vmatpush1.xpose.msra.mxu0 0.0
    %425 = vmatprep.subr.mxu0 0.0
    %426 = vmatpush1.xpose.msra.mxu0 0.0
    %427 = vmatprep.subr.mxu0 0.0
    %428 = vmatpush1.xpose.msra.mxu0 0.0
    %429 = vmatprep.subr.mxu0 0.0
    %430 = vmatpush1.xpose.msra.mxu0 0.0
    %431 = vmatprep.subr.mxu0 0.0
    %432 = vmatpush1.xpose.msra.mxu0 0.0
    %433 = vmatprep.subr.mxu0 0.0
    %434 = vmatpush1.xpose.msra.mxu0 0.0
    %435 = vmatprep.subr.mxu0 0.0
    %436 = vmatpush1.xpose.msra.mxu0 0.0
    %437 = vmatprep.subr.mxu0 0.0
    %438 = vmatpush1.xpose.msra.mxu0 0.0
    %439 = vmatprep.subr.mxu0 0.0
    %440 = vmatpush1.xpose.msra.mxu0 0.0
    %441 = vmatprep.subr.mxu0 0.0
    %442 = vmatpush1.xpose.msra.mxu0 0.0
    %443 = vmatprep.subr.mxu0 0.0
    %444 = vmatpush1.xpose.msra.mxu0 0.0
    %445 = vmatprep.mubr.f32.mxu0 0.0
    %446 = vmatmul.mubr.f32.gmra.mrb[0].mxu0 %v376
    %v447 = vpop.f32.mrb[0].mxu0
    %v448 = vadd.f32 0.0, %v447
    %v449 = vpop.f32.mrb[0].mxu0
    %450 = vdwg.mxu0
    %v452 = vsel %vm75, %v154, 0
    %v455 = vsel %vm75, %v238, 0
    %457 = vmatprep.subr.mxu0 0.0
    %458 = vmatpush1.xpose.msra.mxu0 %v455
    %459 = vmatprep.subr.mxu0 0.0
    %460 = vmatpush1.xpose.msra.mxu0 0.0
    %461 = vmatprep.subr.mxu0 0.0
    %462 = vmatpush1.xpose.msra.mxu0 0.0
    %463 = vmatprep.subr.mxu0 0.0
    %464 = vmatpush1.xpose.msra.mxu0 0.0
    %465 = vmatprep.subr.mxu0 0.0
    %466 = vmatpush1.xpose.msra.mxu0 0.0
    %467 = vmatprep.subr.mxu0 0.0
    %468 = vmatpush1.xpose.msra.mxu0 0.0
    %469 = vmatprep.subr.mxu0 0.0
    %470 = vmatpush1.xpose.msra.mxu0 0.0
    %471 = vmatprep.subr.mxu0 0.0
    %472 = vmatpush1.xpose.msra.mxu0 0.0
    %473 = vmatprep.subr.mxu0 0.0
    %474 = vmatpush1.xpose.msra.mxu0 0.0
    %475 = vmatprep.subr.mxu0 0.0
    %476 = vmatpush1.xpose.msra.mxu0 0.0
    %477 = vmatprep.subr.mxu0 0.0
    %478 = vmatpush1.xpose.msra.mxu0 0.0
    %479 = vmatprep.subr.mxu0 0.0
    %480 = vmatpush1.xpose.msra.mxu0 0.0
    %481 = vmatprep.subr.mxu0 0.0
    %482 = vmatpush1.xpose.msra.mxu0 0.0
    %483 = vmatprep.subr.mxu0 0.0
    %484 = vmatpush1.xpose.msra.mxu0 0.0
    %485 = vmatprep.subr.mxu0 0.0
    %486 = vmatpush1.xpose.msra.mxu0 0.0
    %487 = vmatprep.subr.mxu0 0.0
    %488 = vmatpush1.xpose.msra.mxu0 0.0
    %489 = vmatprep.subr.mxu0 0.0
    %490 = vmatpush1.xpose.msra.mxu0 0.0
    %491 = vmatprep.subr.mxu0 0.0
    %492 = vmatpush1.xpose.msra.mxu0 0.0
    %493 = vmatprep.subr.mxu0 0.0
    %494 = vmatpush1.xpose.msra.mxu0 0.0
    %495 = vmatprep.subr.mxu0 0.0
    %496 = vmatpush1.xpose.msra.mxu0 0.0
    %497 = vmatprep.subr.mxu0 0.0
    %498 = vmatpush1.xpose.msra.mxu0 0.0
    %499 = vmatprep.subr.mxu0 0.0
    %500 = vmatpush1.xpose.msra.mxu0 0.0
    %501 = vmatprep.subr.mxu0 0.0
    %502 = vmatpush1.xpose.msra.mxu0 0.0
    %503 = vmatprep.subr.mxu0 0.0
    %504 = vmatpush1.xpose.msra.mxu0 0.0
    %505 = vmatprep.subr.mxu0 0.0
    %506 = vmatpush1.xpose.msra.mxu0 0.0
    %507 = vmatprep.subr.mxu0 0.0
    %508 = vmatpush1.xpose.msra.mxu0 0.0
    %509 = vmatprep.subr.mxu0 0.0
    %510 = vmatpush1.xpose.msra.mxu0 0.0
    %511 = vmatprep.subr.mxu0 0.0
    %512 = vmatpush1.xpose.msra.mxu0 0.0
    %513 = vmatprep.subr.mxu0 0.0
    %514 = vmatpush1.xpose.msra.mxu0 0.0
    %515 = vmatprep.subr.mxu0 0.0
    %516 = vmatpush1.xpose.msra.mxu0 0.0
    %517 = vmatprep.subr.mxu0 0.0
    %518 = vmatpush1.xpose.msra.mxu0 0.0
    %519 = vmatprep.subr.mxu0 0.0
    %520 = vmatpush1.xpose.msra.mxu0 0.0
    %521 = vmatprep.mubr.f32.mxu0 0.0
    %522 = vmatmul.mubr.f32.gmra.mrb[0].mxu0 %v452
    %v523 = vpop.f32.mrb[0].mxu0
    %v524 = vadd.f32 0.0, %v523
    %v525 = vpop.f32.mrb[0].mxu0
    %526 = vdwg.mxu0
    %v527 = vmul.f32 %v448, 0.25
    %v528 = vmul.f32 %v524, 0.25
    %v529 = vadd.f32 %v527, %v358
    %v530 = vadd.f32 %v528, %v359
    %vm531 = vcmask 64512
    %v532 = vsel %vm531, %v529, -inf
    %533 = vmax.xlane.f32.xlu0 %v532
    %v534 = vpop.xlane.xlu0 %533
    %v535 = vsel %vm531, %v530, -inf
    %536 = vmax.xlane.f32.xlu0 %v535
    %v537 = vpop.xlane.xlu0 %536
    %v538 = vsub.f32 %v529, %v534
    %v539 = vsub.f32 %v530, %v537
    %v540 = vmul.f32 %v538, 1.442695
    %v541 = vpow.pop %v540
    %v542 = vmul.f32 %v539, 1.442695
    %v543 = vpow.pop %v542
    %v544 = vsel %vm531, %v541, 0.0
    %545 = vadd.xlane.f32.xlu0 %v544
    %v546 = vpop.xlane.xlu0 %545
    %v547 = vsel %vm531, %v543, 0.0
    %548 = vadd.xlane.f32.xlu0 %v547
    %v549 = vpop.xlane.xlu0 %548
    %v550 = vrcp.pop %v546
    %v551 = vrcp.pop %v549
    %v552 = vmul.f32 %v541, %v550
    %v553 = vmul.f32 %v543, %v551
    %v555 = vsel %vm531, %v552, 0
    %557 = vmatprep.subr.mxu0 0.0
    %558 = vmatpush1.msra.mxu0 %v317
    %559 = vmatprep.subr.mxu0 0.0
    %560 = vmatpush1.msra.mxu0 0.0
    %561 = vmatprep.subr.mxu0 0.0
    %562 = vmatpush1.msra.mxu0 0.0
    %563 = vmatprep.subr.mxu0 0.0
    %564 = vmatpush1.msra.mxu0 0.0
    %565 = vmatprep.subr.mxu0 0.0
    %566 = vmatpush1.msra.mxu0 0.0
    %567 = vmatprep.subr.mxu0 0.0
    %568 = vmatpush1.msra.mxu0 0.0
    %569 = vmatprep.subr.mxu0 0.0
    %570 = vmatpush1.msra.mxu0 0.0
    %571 = vmatprep.subr.mxu0 0.0
    %572 = vmatpush1.msra.mxu0 0.0
    %573 = vmatprep.subr.mxu0 0.0
    %574 = vmatpush1.msra.mxu0 0.0
    %575 = vmatprep.subr.mxu0 0.0
    %576 = vmatpush1.msra.mxu0 0.0
    %577 = vmatprep.subr.mxu0 0.0
    %578 = vmatpush1.msra.mxu0 0.0
    %579 = vmatprep.subr.mxu0 0.0
    %580 = vmatpush1.msra.mxu0 0.0
    %581 = vmatprep.subr.mxu0 0.0
    %582 = vmatpush1.msra.mxu0 0.0
    %583 = vmatprep.subr.mxu0 0.0
    %584 = vmatpush1.msra.mxu0 0.0
    %585 = vmatprep.subr.mxu0 0.0
    %586 = vmatpush1.msra.mxu0 0.0
    %587 = vmatprep.subr.mxu0 0.0
    %588 = vmatpush1.msra.mxu0 0.0
    %589 = vmatprep.subr.mxu0 0.0
    %590 = vmatpush1.msra.mxu0 0.0
    %591 = vmatprep.subr.mxu0 0.0
    %592 = vmatpush1.msra.mxu0 0.0
    %593 = vmatprep.subr.mxu0 0.0
    %594 = vmatpush1.msra.mxu0 0.0
    %595 = vmatprep.subr.mxu0 0.0
    %596 = vmatpush1.msra.mxu0 0.0
    %597 = vmatprep.subr.mxu0 0.0
    %598 = vmatpush1.msra.mxu0 0.0
    %599 = vmatprep.subr.mxu0 0.0
    %600 = vmatpush1.msra.mxu0 0.0
    %601 = vmatprep.subr.mxu0 0.0
    %602 = vmatpush1.msra.mxu0 0.0
    %603 = vmatprep.subr.mxu0 0.0
    %604 = vmatpush1.msra.mxu0 0.0
    %605 = vmatprep.subr.mxu0 0.0
    %606 = vmatpush1.msra.mxu0 0.0
    %607 = vmatprep.subr.mxu0 0.0
    %608 = vmatpush1.msra.mxu0 0.0
    %609 = vmatprep.subr.mxu0 0.0
    %610 = vmatpush1.msra.mxu0 0.0
    %611 = vmatprep.subr.mxu0 0.0
    %612 = vmatpush1.msra.mxu0 0.0
    %613 = vmatprep.subr.mxu0 0.0
    %614 = vmatpush1.msra.mxu0 0.0
    %615 = vmatprep.subr.mxu0 0.0
    %616 = vmatpush1.msra.mxu0 0.0
    %617 = vmatprep.subr.mxu0 0.0
    %618 = vmatpush1.msra.mxu0 0.0
    %619 = vmatprep.subr.mxu0 0.0
    %620 = vmatpush1.msra.mxu0 0.0
    %621 = vmatprep.mubr.f32.mxu0 0.0
    %622 = vmatmul.mubr.f32.gmra.mrb[0].mxu0 %v555
    %v623 = vpop.f32.mrb[0].mxu0
    %v624 = vadd.f32 0.0, %v623
    %v625 = vpop.f32.mrb[0].mxu0
    %626 = vdwg.mxu0
    %v628 = vsel %vm531, %v553, 0
    %630 = vmatprep.subr.mxu0 0.0
    %631 = vmatpush1.msra.mxu0 %v322
    %632 = vmatprep.subr.mxu0 0.0
    %633 = vmatpush1.msra.mxu0 0.0
    %634 = vmatprep.subr.mxu0 0.0
    %635 = vmatpush1.msra.mxu0 0.0
    %636 = vmatprep.subr.mxu0 0.0
    %637 = vmatpush1.msra.mxu0 0.0
    %638 = vmatprep.subr.mxu0 0.0
    %639 = vmatpush1.msra.mxu0 0.0
    %640 = vmatprep.subr.mxu0 0.0
    %641 = vmatpush1.msra.mxu0 0.0
    %642 = vmatprep.subr.mxu0 0.0
    %643 = vmatpush1.msra.mxu0 0.0
    %644 = vmatprep.subr.mxu0 0.0
    %645 = vmatpush1.msra.mxu0 0.0
    %646 = vmatprep.subr.mxu0 0.0
    %647 = vmatpush1.msra.mxu0 0.0
    %648 = vmatprep.subr.mxu0 0.0
    %649 = vmatpush1.msra.mxu0 0.0
    %650 = vmatprep.subr.mxu0 0.0
    %651 = vmatpush1.msra.mxu0 0.0
    %652 = vmatprep.subr.mxu0 0.0
    %653 = vmatpush1.msra.mxu0 0.0
    %654 = vmatprep.subr.mxu0 0.0
    %655 = vmatpush1.msra.mxu0 0.0
    %656 = vmatprep.subr.mxu0 0.0
    %657 = vmatpush1.msra.mxu0 0.0
    %658 = vmatprep.subr.mxu0 0.0
    %659 = vmatpush1.msra.mxu0 0.0
    %660 = vmatprep.subr.mxu0 0.0
    %661 = vmatpush1.msra.mxu0 0.0
    %662 = vmatprep.subr.mxu0 0.0
    %663 = vmatpush1.msra.mxu0 0.0
    %664 = vmatprep.subr.mxu0 0.0
    %665 = vmatpush1.msra.mxu0 0.0
    %666 = vmatprep.subr.mxu0 0.0
    %667 = vmatpush1.msra.mxu0 0.0
    %668 = vmatprep.subr.mxu0 0.0
    %669 = vmatpush1.msra.mxu0 0.0
    %670 = vmatprep.subr.mxu0 0.0
    %671 = vmatpush1.msra.mxu0 0.0
    %672 = vmatprep.subr.mxu0 0.0
    %673 = vmatpush1.msra.mxu0 0.0
    %674 = vmatprep.subr.mxu0 0.0
    %675 = vmatpush1.msra.mxu0 0.0
    %676 = vmatprep.subr.mxu0 0.0
    %677 = vmatpush1.msra.mxu0 0.0
    %678 = vmatprep.subr.mxu0 0.0
    %679 = vmatpush1.msra.mxu0 0.0
    %680 = vmatprep.subr.mxu0 0.0
    %681 = vmatpush1.msra.mxu0 0.0
    %682 = vmatprep.subr.mxu0 0.0
    %683 = vmatpush1.msra.mxu0 0.0
    %684 = vmatprep.subr.mxu0 0.0
    %685 = vmatpush1.msra.mxu0 0.0
    %686 = vmatprep.subr.mxu0 0.0
    %687 = vmatpush1.msra.mxu0 0.0
    %688 = vmatprep.subr.mxu0 0.0
    %689 = vmatpush1.msra.mxu0 0.0
    %690 = vmatprep.subr.mxu0 0.0
    %691 = vmatpush1.msra.mxu0 0.0
    %692 = vmatprep.subr.mxu0 0.0
    %693 = vmatpush1.msra.mxu0 0.0
    %694 = vmatprep.mubr.f32.mxu0 0.0
    %695 = vmatmul.mubr.f32.gmra.mrb[0].mxu0 %v628
    %v696 = vpop.f32.mrb[0].mxu0
    %v697 = vadd.f32 0.0, %v696
    %v698 = vpop.f32.mrb[0].mxu0
    %699 = vdwg.mxu0
    %v700 = vld [vmem:[%s8] sm:$0xff]
    %v701 = vld [vmem:[%s8 + $0x8] sm:$0xff]
    %v702 = vld [vmem:[%s9] sm:$0x1]
    %v704 = vlaneseq
    %v705 = vshrl.u32 %v704, 7
    %v706 = vsub.s32 0, %v705
    %v707 = vrot.slane %v702, %v706
    %v710 = vsel %vm75, %v624, 0
    %v713 = vsel %vm75, %v697, 0
    %715 = vmatprep.subr.mxu0 0.0
    %716 = vmatpush1.msra.mxu0 %v700
    %717 = vmatprep.subr.mxu0 0.0
    %718 = vmatpush1.msra.mxu0 %v701
    %719 = vmatprep.subr.mxu0 0.0
    %720 = vmatpush1.msra.mxu0 0.0
    %721 = vmatprep.subr.mxu0 0.0
    %722 = vmatpush1.msra.mxu0 0.0
    %723 = vmatprep.subr.mxu0 0.0
    %724 = vmatpush1.msra.mxu0 0.0
    %725 = vmatprep.subr.mxu0 0.0
    %726 = vmatpush1.msra.mxu0 0.0
    %727 = vmatprep.subr.mxu0 0.0
    %728 = vmatpush1.msra.mxu0 0.0
    %729 = vmatprep.subr.mxu0 0.0
    %730 = vmatpush1.msra.mxu0 0.0
    %731 = vmatprep.subr.mxu0 0.0
    %732 = vmatpush1.msra.mxu0 0.0
    %733 = vmatprep.subr.mxu0 0.0
    %734 = vmatpush1.msra.mxu0 0.0
    %735 = vmatprep.subr.mxu0 0.0
    %736 = vmatpush1.msra.mxu0 0.0
    %737 = vmatprep.subr.mxu0 0.0
    %738 = vmatpush1.msra.mxu0 0.0
    %739 = vmatprep.subr.mxu0 0.0
    %740 = vmatpush1.msra.mxu0 0.0
    %741 = vmatprep.subr.mxu0 0.0
    %742 = vmatpush1.msra.mxu0 0.0
    %743 = vmatprep.subr.mxu0 0.0
    %744 = vmatpush1.msra.mxu0 0.0
    %745 = vmatprep.subr.mxu0 0.0
    %746 = vmatpush1.msra.mxu0 0.0
    %747 = vmatprep.subr.mxu0 0.0
    %748 = vmatpush1.msra.mxu0 0.0
    %749 = vmatprep.subr.mxu0 0.0
    %750 = vmatpush1.msra.mxu0 0.0
    %751 = vmatprep.subr.mxu0 0.0
    %752 = vmatpush1.msra.mxu0 0.0
    %753 = vmatprep.subr.mxu0 0.0
    %754 = vmatpush1.msra.mxu0 0.0
    %755 = vmatprep.subr.mxu0 0.0
    %756 = vmatpush1.msra.mxu0 0.0
    %757 = vmatprep.subr.mxu0 0.0
    %758 = vmatpush1.msra.mxu0 0.0
    %759 = vmatprep.subr.mxu0 0.0
    %760 = vmatpush1.msra.mxu0 0.0
    %761 = vmatprep.subr.mxu0 0.0
    %762 = vmatpush1.msra.mxu0 0.0
    %763 = vmatprep.subr.mxu0 0.0
    %764 = vmatpush1.msra.mxu0 0.0
    %765 = vmatprep.subr.mxu0 0.0
    %766 = vmatpush1.msra.mxu0 0.0
    %767 = vmatprep.subr.mxu0 0.0
    %768 = vmatpush1.msra.mxu0 0.0
    %769 = vmatprep.subr.mxu0 0.0
    %770 = vmatpush1.msra.mxu0 0.0
    %771 = vmatprep.subr.mxu0 0.0
    %772 = vmatpush1.msra.mxu0 0.0
    %773 = vmatprep.subr.mxu0 0.0
    %774 = vmatpush1.msra.mxu0 0.0
    %775 = vmatprep.subr.mxu0 0.0
    %776 = vmatpush1.msra.mxu0 0.0
    %777 = vmatprep.subr.mxu0 0.0
    %778 = vmatpush1.msra.mxu0 0.0
    %779 = vmatprep.mubr.f32.mxu0 0.0
    %780 = vmatmul.mubr.f32.gmra.mrb[0].mxu0 %v710
    %v781 = vpop.f32.mrb[0].mxu0
    %v782 = vadd.f32 %v707, %v781
    %v783 = vpop.f32.mrb[0].mxu0
    %784 = vmatprep.mubr.f32.mxu0 0.0
    %785 = vmatmul.mubr.f32.gmra.mrb[0].mxu0 %v713
    %v786 = vpop.f32.mrb[0].mxu0
    %v787 = vadd.f32 %v707, %v786
    %v788 = vpop.f32.mrb[0].mxu0
    %789 = vdwg.mxu0
    %v790 = vsel %vm75, %v782, 0.0
    %791 = vadd.xlane.f32.xlu0 %v790
    %v792 = vpop.xlane.xlu0 %791
    %v793 = vsel %vm75, %v787, 0.0
    %794 = vadd.xlane.f32.xlu0 %v793
    %v795 = vpop.xlane.xlu0 %794
    %v796 = vrcp.pop 16.0
    %v797 = vmul.f32 %v792, %v796
    %v798 = vmul.f32 %v795, %v796
    %v799 = vsub.f32 %v782, %v797
    %v800 = vsub.f32 %v787, %v798
    %v801 = vmul.f32 %v799, %v799
    %v802 = vmul.f32 %v800, %v800
    %v803 = vsel %vm75, %v801, 0.0
    %804 = vadd.xlane.f32.xlu0 %v803
    %v805 = vpop.xlane.xlu0 %804
    %v806 = vsel %vm75, %v802, 0.0
    %807 = vadd.xlane.f32.xlu0 %v806
    %v808 = vpop.xlane.xlu0 %807
    %v809 = vmul.f32 %v805, %v796
    %v810 = vmul.f32 %v808, %v796
    %v811 = vadd.f32 %v809, 1e-05
    %v812 = vadd.f32 %v810, 1e-05
    %v813 = vrsqrt.pop %v811
    %v814 = vrsqrt.pop %v812
    %v815 = vmul.f32 %v799, %v813
    %v816 = vmul.f32 %v800, %v814
    %v817 = vld [vmem:[%s10] sm:$0x1]
    %v819 = vlaneseq
    %v820 = vshrl.u32 %v819, 7
    %v821 = vsub.s32 0, %v820
    %v822 = vrot.slane %v817, %v821
    %v824 = vmul.f32 %v815, %v822
    %v825 = vmul.f32 %v816, %v822
    %v826 = vld [vmem:[%s11] sm:$0x1]
    %v828 = vlaneseq
    %v829 = vshrl.u32 %v828, 7
    %v830 = vsub.s32 0, %v829
    %v831 = vrot.slane %v826, %v830
    %v833 = vadd.f32 %v824, %v831
    %v834 = vadd.f32 %v825, %v831
    %v835 = vadd.f32 %v64, %v833
    %v836 = vadd.f32 %v65, %v834
    %v838 = vsel %vm75, %v374, 0
    %840 = vmatprep.subr.mxu0 0.0
    %841 = vmatpush1.msra.mxu0 %v835
    %842 = vmatprep.subr.mxu0 0.0
    %843 = vmatpush1.msra.mxu0 %v836
    %844 = vmatprep.subr.mxu0 0.0
    %845 = vmatpush1.msra.mxu0 0.0
    %846 = vmatprep.subr.mxu0 0.0
    %847 = vmatpush1.msra.mxu0 0.0
    %848 = vmatprep.subr.mxu0 0.0
    %849 = vmatpush1.msra.mxu0 0.0
    %850 = vmatprep.subr.mxu0 0.0
    %851 = vmatpush1.msra.mxu0 0.0
    %852 = vmatprep.subr.mxu0 0.0
    %853 = vmatpush1.msra.mxu0 0.0
    %854 = vmatprep.subr.mxu0 0.0
    %855 = vmatpush1.msra.mxu0 0.0
    %856 = vmatprep.subr.mxu0 0.0
    %857 = vmatpush1.msra.mxu0 0.0
    %858 = vmatprep.subr.mxu0 0.0
    %859 = vmatpush1.msra.mxu0 0.0
    %860 = vmatprep.subr.mxu0 0.0
    %861 = vmatpush1.msra.mxu0 0.0
    %862 = vmatprep.subr.mxu0 0.0
    %863 = vmatpush1.msra.mxu0 0.0
    %864 = vmatprep.subr.mxu0 0.0
    %865 = vmatpush1.msra.mxu0 0.0
    %866 = vmatprep.subr.mxu0 0.0
    %867 = vmatpush1.msra.mxu0 0.0
    %868 = vmatprep.subr.mxu0 0.0
    %869 = vmatpush1.msra.mxu0 0.0
    %870 = vmatprep.subr.mxu0 0.0
    %871 = vmatpush1.msra.mxu0 0.0
    %872 = vmatprep.subr.mxu0 0.0
    %873 = vmatpush1.msra.mxu0 0.0
    %874 = vmatprep.subr.mxu0 0.0
    %875 = vmatpush1.msra.mxu0 0.0
    %876 = vmatprep.subr.mxu0 0.0
    %877 = vmatpush1.msra.mxu0 0.0
    %878 = vmatprep.subr.mxu0 0.0
    %879 = vmatpush1.msra.mxu0 0.0
    %880 = vmatprep.subr.mxu0 0.0
    %881 = vmatpush1.msra.mxu0 0.0
    %882 = vmatprep.subr.mxu0 0.0
    %883 = vmatpush1.msra.mxu0 0.0
    %884 = vmatprep.subr.mxu0 0.0
    %885 = vmatpush1.msra.mxu0 0.0
    %886 = vmatprep.subr.mxu0 0.0
    %887 = vmatpush1.msra.mxu0 0.0
    %888 = vmatprep.subr.mxu0 0.0
    %889 = vmatpush1.msra.mxu0 0.0
    %890 = vmatprep.subr.mxu0 0.0
    %891 = vmatpush1.msra.mxu0 0.0
    %892 = vmatprep.subr.mxu0 0.0
    %893 = vmatpush1.msra.mxu0 0.0
    %894 = vmatprep.subr.mxu0 0.0
    %895 = vmatpush1.msra.mxu0 0.0
    %896 = vmatprep.subr.mxu0 0.0
    %897 = vmatpush1.msra.mxu0 0.0
    %898 = vmatprep.subr.mxu0 0.0
    %899 = vmatpush1.msra.mxu0 0.0
    %900 = vmatprep.subr.mxu0 0.0
    %901 = vmatpush1.msra.mxu0 0.0
    %902 = vmatprep.subr.mxu0 0.0
    %903 = vmatpush1.msra.mxu0 0.0
    %904 = vmatprep.mubr.f32.mxu0 0.0
    %905 = vmatmul.mubr.f32.gmra.mrb[0].mxu0 %v838
    %v906 = vpop.f32.mrb[0].mxu0
    %v907 = vadd.f32 0.0, %v906
    %v908 = vpop.f32.mrb[0].mxu0
    %909 = vdwg.mxu0
    %v910 = vld [vmem:[%s12] sm:$0xff]
    %v911 = vld [vmem:[%s12 + $0x8] sm:$0xff]
    %v912 = vld [vmem:[%s13] sm:$0x1]
    %v914 = vlaneseq
    %v915 = vshrl.u32 %v914, 7
    %v916 = vsub.s32 0, %v915
    %v917 = vrot.slane %v912, %v916
    %v920 = vsel %vm75, %v907, 0
    %922 = vmatprep.subr.mxu0 0.0
    %923 = vmatpush1.msra.mxu0 %v910
    %924 = vmatprep.subr.mxu0 0.0
    %925 = vmatpush1.msra.mxu0 %v911
    %926 = vmatprep.subr.mxu0 0.0
    %927 = vmatpush1.msra.mxu0 0.0
    %928 = vmatprep.subr.mxu0 0.0
    %929 = vmatpush1.msra.mxu0 0.0
    %930 = vmatprep.subr.mxu0 0.0
    %931 = vmatpush1.msra.mxu0 0.0
    %932 = vmatprep.subr.mxu0 0.0
    %933 = vmatpush1.msra.mxu0 0.0
    %934 = vmatprep.subr.mxu0 0.0
    %935 = vmatpush1.msra.mxu0 0.0
    %936 = vmatprep.subr.mxu0 0.0
    %937 = vmatpush1.msra.mxu0 0.0
    %938 = vmatprep.subr.mxu0 0.0
    %939 = vmatpush1.msra.mxu0 0.0
    %940 = vmatprep.subr.mxu0 0.0
    %941 = vmatpush1.msra.mxu0 0.0
    %942 = vmatprep.subr.mxu0 0.0
    %943 = vmatpush1.msra.mxu0 0.0
    %944 = vmatprep.subr.mxu0 0.0
    %945 = vmatpush1.msra.mxu0 0.0
    %946 = vmatprep.subr.mxu0 0.0
    %947 = vmatpush1.msra.mxu0 0.0
    %948 = vmatprep.subr.mxu0 0.0
    %949 = vmatpush1.msra.mxu0 0.0
    %950 = vmatprep.subr.mxu0 0.0
    %951 = vmatpush1.msra.mxu0 0.0
    %952 = vmatprep.subr.mxu0 0.0
    %953 = vmatpush1.msra.mxu0 0.0
    %954 = vmatprep.subr.mxu0 0.0
    %955 = vmatpush1.msra.mxu0 0.0
    %956 = vmatprep.subr.mxu0 0.0
    %957 = vmatpush1.msra.mxu0 0.0
    %958 = vmatprep.subr.mxu0 0.0
    %959 = vmatpush1.msra.mxu0 0.0
    %960 = vmatprep.subr.mxu0 0.0
    %961 = vmatpush1.msra.mxu0 0.0
    %962 = vmatprep.subr.mxu0 0.0
    %963 = vmatpush1.msra.mxu0 0.0
    %964 = vmatprep.subr.mxu0 0.0
    %965 = vmatpush1.msra.mxu0 0.0
    %966 = vmatprep.subr.mxu0 0.0
    %967 = vmatpush1.msra.mxu0 0.0
    %968 = vmatprep.subr.mxu0 0.0
    %969 = vmatpush1.msra.mxu0 0.0
    %970 = vmatprep.subr.mxu0 0.0
    %971 = vmatpush1.msra.mxu0 0.0
    %972 = vmatprep.subr.mxu0 0.0
    %973 = vmatpush1.msra.mxu0 0.0
    %974 = vmatprep.subr.mxu0 0.0
    %975 = vmatpush1.msra.mxu0 0.0
    %976 = vmatprep.subr.mxu0 0.0
    %977 = vmatpush1.msra.mxu0 0.0
    %978 = vmatprep.subr.mxu0 0.0
    %979 = vmatpush1.msra.mxu0 0.0
    %980 = vmatprep.subr.mxu0 0.0
    %981 = vmatpush1.msra.mxu0 0.0
    %982 = vmatprep.subr.mxu0 0.0
    %983 = vmatpush1.msra.mxu0 0.0
    %984 = vmatprep.subr.mxu0 0.0
    %985 = vmatpush1.msra.mxu0 0.0
    %986 = vmatprep.mubr.f32.mxu0 0.0
    %987 = vmatmul.mubr.f32.gmra.mrb[0].mxu0 %v920
    %v988 = vpop.f32.mrb[0].mxu0
    %v989 = vadd.f32 %v917, %v988
    %v990 = vpop.f32.mrb[0].mxu0
    %991 = vdwg.mxu0
    %v992 = vmax.f32 %v989, 0.0
    %v993 = vld [vmem:[%s14] sm:$0xff]
    %v994 = vld [vmem:[%s14 + $0x8] sm:$0xff]
    %v995 = vld [vmem:[%s14 + $0x10] sm:$0xff]
    %v996 = vld [vmem:[%s14 + $0x18] sm:$0xff]
    %v997 = vld [vmem:[%s14 + $0x20] sm:$0xff]
    %v998 = vld [vmem:[%s14 + $0x28] sm:$0xff]
    %v999 = vld [vmem:[%s14 + $0x30] sm:$0xff]
    %v1000 = vld [vmem:[%s14 + $0x38] sm:$0xff]
    %v1001 = vld [vmem:[%s15] sm:$0x1]
    %v1003 = vlaneseq
    %v1004 = vshrl.u32 %v1003, 7
    %v1005 = vsub.s32 0, %v1004
    %v1006 = vrot.slane %v1001, %v1005
    %vm1008 = vcmask 523264
    %v1010 = vsel %vm1008, %v992, 0
    %1012 = vmatprep.subr.mxu0 0.0
    %1013 = vmatpush1.msra.mxu0 %v993
    %1014 = vmatprep.subr.mxu0 0.0
    %1015 = vmatpush1.msra.mxu0 %v994
    %1016 = vmatprep.subr.mxu0 0.0
    %1017 = vmatpush1.msra.mxu0 %v995
    %1018 = vmatprep.subr.mxu0 0.0
    %1019 = vmatpush1.msra.mxu0 %v996
    %1020 = vmatprep.subr.mxu0 0.0
    %1021 = vmatpush1.msra.mxu0 %v997
    %1022 = vmatprep.subr.mxu0 0.0
    %1023 = vmatpush1.msra.mxu0 %v998
    %1024 = vmatprep.subr.mxu0 0.0
    %1025 = vmatpush1.msra.mxu0 %v999
    %1026 = vmatprep.subr.mxu0 0.0
    %1027 = vmatpush1.msra.mxu0 %v1000
    %1028 = vmatprep.subr.mxu0 0.0
    %1029 = vmatpush1.msra.mxu0 0.0
    %1030 = vmatprep.subr.mxu0 0.0
    %1031 = vmatpush1.msra.mxu0 0.0
    %1032 = vmatprep.subr.mxu0 0.0
    %1033 = vmatpush1.msra.mxu0 0.0
    %1034 = vmatprep.subr.mxu0 0.0
    %1035 = vmatpush1.msra.mxu0 0.0
    %1036 = vmatprep.subr.mxu0 0.0
    %1037 = vmatpush1.msra.mxu0 0.0
    %1038 = vmatprep.subr.mxu0 0.0
    %1039 = vmatpush1.msra.mxu0 0.0
    %1040 = vmatprep.subr.mxu0 0.0
    %1041 = vmatpush1.msra.mxu0 0.0
    %1042 = vmatprep.subr.mxu0 0.0
    %1043 = vmatpush1.msra.mxu0 0.0
    %1044 = vmatprep.subr.mxu0 0.0
    %1045 = vmatpush1.msra.mxu0 0.0
    %1046 = vmatprep.subr.mxu0 0.0
    %1047 = vmatpush1.msra.mxu0 0.0
    %1048 = vmatprep.subr.mxu0 0.0
    %1049 = vmatpush1.msra.mxu0 0.0
    %1050 = vmatprep.subr.mxu0 0.0
    %1051 = vmatpush1.msra.mxu0 0.0
    %1052 = vmatprep.subr.mxu0 0.0
    %1053 = vmatpush1.msra.mxu0 0.0
    %1054 = vmatprep.subr.mxu0 0.0
    %1055 = vmatpush1.msra.mxu0 0.0
    %1056 = vmatprep.subr.mxu0 0.0
    %1057 = vmatpush1.msra.mxu0 0.0
    %1058 = vmatprep.subr.mxu0 0.0
    %1059 = vmatpush1.msra.mxu0 0.0
    %1060 = vmatprep.subr.mxu0 0.0
    %1061 = vmatpush1.msra.mxu0 0.0
    %1062 = vmatprep.subr.mxu0 0.0
    %1063 = vmatpush1.msra.mxu0 0.0
    %1064 = vmatprep.subr.mxu0 0.0
    %1065 = vmatpush1.msra.mxu0 0.0
    %1066 = vmatprep.subr.mxu0 0.0
    %1067 = vmatpush1.msra.mxu0 0.0
    %1068 = vmatprep.subr.mxu0 0.0
    %1069 = vmatpush1.msra.mxu0 0.0
    %1070 = vmatprep.subr.mxu0 0.0
    %1071 = vmatpush1.msra.mxu0 0.0
    %1072 = vmatprep.subr.mxu0 0.0
    %1073 = vmatpush1.msra.mxu0 0.0
    %1074 = vmatprep.subr.mxu0 0.0
    %1075 = vmatpush1.msra.mxu0 0.0
    %1076 = vmatprep.mubr.f32.mxu0 0.0
    %1077 = vmatmul.mubr.f32.gmra.mrb[0].mxu0 %v1010
    %v1078 = vpop.f32.mrb[0].mxu0
    %v1079 = vadd.f32 %v1006, %v1078
    %v1080 = vpop.f32.mrb[0].mxu0
    %1081 = vdwg.mxu0
    %v1082 = vmax.f32 %v1079, 0.0
    %v1083 = vld [vmem:[%s16] sm:$0xff]
    %v1084 = vld [vmem:[%s16 + $0x8] sm:$0xff]
    %v1085 = vld [vmem:[%s16 + $0x10] sm:$0xff]
    %v1086 = vld [vmem:[%s16 + $0x18] sm:$0xff]
    %v1087 = vld [vmem:[%s17] sm:$0x1]
    %v1089 = vlaneseq
    %v1090 = vshrl.u32 %v1089, 7
    %v1091 = vsub.s32 0, %v1090
    %v1092 = vrot.slane %v1087, %v1091
    %vm1094 = vcmask 261120
    %v1096 = vsel %vm1094, %v1082, 0
    %1098 = vmatprep.subr.mxu0 0.0
    %1099 = vmatpush1.msra.mxu0 %v1083
    %1100 = vmatprep.subr.mxu0 0.0
    %1101 = vmatpush1.msra.mxu0 %v1084
    %1102 = vmatprep.subr.mxu0 0.0
    %1103 = vmatpush1.msra.mxu0 %v1085
    %1104 = vmatprep.subr.mxu0 0.0
    %1105 = vmatpush1.msra.mxu0 %v1086
    %1106 = vmatprep.subr.mxu0 0.0
    %1107 = vmatpush1.msra.mxu0 0.0
    %1108 = vmatprep.subr.mxu0 0.0
    %1109 = vmatpush1.msra.mxu0 0.0
    %1110 = vmatprep.subr.mxu0 0.0
    %1111 = vmatpush1.msra.mxu0 0.0
    %1112 = vmatprep.subr.mxu0 0.0
    %1113 = vmatpush1.msra.mxu0 0.0
    %1114 = vmatprep.subr.mxu0 0.0
    %1115 = vmatpush1.msra.mxu0 0.0
    %1116 = vmatprep.subr.mxu0 0.0
    %1117 = vmatpush1.msra.mxu0 0.0
    %1118 = vmatprep.subr.mxu0 0.0
    %1119 = vmatpush1.msra.mxu0 0.0
    %1120 = vmatprep.subr.mxu0 0.0
    %1121 = vmatpush1.msra.mxu0 0.0
    %1122 = vmatprep.subr.mxu0 0.0
    %1123 = vmatpush1.msra.mxu0 0.0
    %1124 = vmatprep.subr.mxu0 0.0
    %1125 = vmatpush1.msra.mxu0 0.0
    %1126 = vmatprep.subr.mxu0 0.0
    %1127 = vmatpush1.msra.mxu0 0.0
    %1128 = vmatprep.subr.mxu0 0.0
    %1129 = vmatpush1.msra.mxu0 0.0
    %1130 = vmatprep.subr.mxu0 0.0
    %1131 = vmatpush1.msra.mxu0 0.0
    %1132 = vmatprep.subr.mxu0 0.0
    %1133 = vmatpush1.msra.mxu0 0.0
    %1134 = vmatprep.subr.mxu0 0.0
    %1135 = vmatpush1.msra.mxu0 0.0
    %1136 = vmatprep.subr.mxu0 0.0
    %1137 = vmatpush1.msra.mxu0 0.0
    %1138 = vmatprep.subr.mxu0 0.0
    %1139 = vmatpush1.msra.mxu0 0.0
    %1140 = vmatprep.subr.mxu0 0.0
    %1141 = vmatpush1.msra.mxu0 0.0
    %1142 = vmatprep.subr.mxu0 0.0
    %1143 = vmatpush1.msra.mxu0 0.0
    %1144 = vmatprep.subr.mxu0 0.0
    %1145 = vmatpush1.msra.mxu0 0.0
    %1146 = vmatprep.subr.mxu0 0.0
    %1147 = vmatpush1.msra.mxu0 0.0
    %1148 = vmatprep.subr.mxu0 0.0
    %1149 = vmatpush1.msra.mxu0 0.0
    %1150 = vmatprep.subr.mxu0 0.0
    %1151 = vmatpush1.msra.mxu0 0.0
    %1152 = vmatprep.subr.mxu0 0.0
    %1153 = vmatpush1.msra.mxu0 0.0
    %1154 = vmatprep.subr.mxu0 0.0
    %1155 = vmatpush1.msra.mxu0 0.0
    %1156 = vmatprep.subr.mxu0 0.0
    %1157 = vmatpush1.msra.mxu0 0.0
    %1158 = vmatprep.subr.mxu0 0.0
    %1159 = vmatpush1.msra.mxu0 0.0
    %1160 = vmatprep.subr.mxu0 0.0
    %1161 = vmatpush1.msra.mxu0 0.0
    %1162 = vmatprep.mubr.f32.mxu0 0.0
    %1163 = vmatmul.mubr.f32.gmra.mrb[0].mxu0 %v1096
    %v1164 = vpop.f32.mrb[0].mxu0
    %v1165 = vadd.f32 %v1092, %v1164
    %v1166 = vpop.f32.mrb[0].mxu0
    %1167 = vdwg.mxu0
    %vm1168 = vcmask 25600
    %1169 = vst.msk [vmem:[#allocation4] sm:$0x3] %vm1168, %v1165
    // Predicated region
    $region70: #{tpu_custom_call.1} parent=1 // pred_check
      _
    $region71: #{tpu_custom_call.1} parent=1 // pred_check_branch
      %1171 = sbr.rel (0) target = $region73
    $region72: #{tpu_custom_call.1} parent=1 // pred_region
      %s1173 = ssub.s32 32, 32
      %1174 = vsyncadd [#allocation5], %s1173
      %s1176 = sshll.u32 [#allocation4], 4
      %s1177 = int_to_ptr.vmem [resolvable:$true] %s1176
      %1179 = dma.vmem_to_hbm [thread:$0]  %s1177, 32, %s18, [#allocation5]
    $region73: #{tpu_custom_call.1} parent=1 // pred_fallthru
      _
    // Predicated region
    $region74: #{tpu_custom_call.1} parent=1 // pred_check
      _
    $region75: #{tpu_custom_call.1} parent=1 // pred_check_branch
      %1181 = sbr.rel (0) target = $region77
    $region76: #{tpu_custom_call.1} parent=1 // pred_region
      %1182 = dma.done [#allocation5], 32
    $region77: #{tpu_custom_call.1} parent=1 // pred_fallthru
      _
    %1183 = vsyncpa [#allocation5], 1

</llo_original>
